<compile_context>
chip_gen: v5e
topology: v5e:2x2
jax: 0.10.0
libtpu: 0.0.40
codegen_flags: <defaults>
</compile_context>

<pallas_src>
import functools

import jax
import jax.numpy as jnp
from jax.experimental import pallas as pl
from jax.experimental.pallas import tpu as pltpu


def _round_up(x, m):
    return ((x + m - 1) // m) * m


def _saplma_kernel(x_ref, y_ref,
                   w1_ref, b1_ref,
                   w2_ref, b2_ref,
                   w3_ref, b3_ref,
                   w4_ref, b4_ref,
                   out_ref, loss_ref,
                   *, batch):
    # ---- MLP forward on one batch tile -------------------------------------
    x = x_ref[...]

    # Layer 1: Linear(input_dim, 256) + ReLU   (bf16 MXU, f32 accumulate)
    h = jnp.dot(x.astype(jnp.bfloat16), w1_ref[...],
                preferred_element_type=jnp.float32) + b1_ref[...]
    h = jnp.maximum(h, 0.0)

    # Layer 2: Linear(256, 128) + ReLU
    h = jnp.dot(h.astype(jnp.bfloat16), w2_ref[...],
                preferred_element_type=jnp.float32) + b2_ref[...]
    h = jnp.maximum(h, 0.0)

    # Layer 3: Linear(128, 64) + ReLU
    h = jnp.dot(h.astype(jnp.bfloat16), w3_ref[...],
                preferred_element_type=jnp.float32) + b3_ref[...]
    h = jnp.maximum(h, 0.0)

    # Layer 4: Linear(64, 1) + Sigmoid.  N=1 matmul replaced by a VPU multiply
    # + lane reduction (w4 stored as a (1, 64) f32 row).
    logits = jnp.sum(h * w4_ref[...], axis=-1, keepdims=True) + b4_ref[...]
    out = 1.0 / (1.0 + jnp.exp(-logits))          # sigmoid (EUP exp + divide)
    out_ref[...] = out

    # ---- BCELoss partial sum for this tile (PyTorch clamps log at -100) ----
    y = y_ref[...].astype(jnp.float32)
    log_p = jnp.maximum(jnp.log(out), -100.0)
    log_1mp = jnp.maximum(jnp.log(1.0 - out), -100.0)
    per_elem = -(y * log_p + (1.0 - y) * log_1mp)

    # Mask out batch-padding rows so the mean in the wrapper is exact.
    tm = out_ref.shape[0]
    rows = pl.program_id(0) * tm + jax.lax.broadcasted_iota(jnp.int32, (tm, 1), 0)
    per_elem = jnp.where(rows < batch, per_elem, 0.0)

    loss_ref[0, 0] = jnp.sum(per_elem)


def saplma_forward(state, label, params, *, tm=128):
    """Returns (out, loss) exactly like SAPLMANet.forward(state, label)."""
    B, input_dim = state.shape
    (w1, b1), (w2, b2), (w3, b3), (w4, b4) = params

    # Batch tile: 128 rows by default (safe on v5e/v6e/v7x); shrink for tiny B.
    TM = min(tm, _round_up(B, 8))
    B_pad = _round_up(B, TM)
    if B_pad != B:
        pad = B_pad - B
        state = jnp.pad(state, ((0, pad), (0, 0)))
        label = jnp.pad(label, ((0, pad), (0, 0)))
    num_tiles = B_pad // TM

    # Batch-tiled operands.
    x_spec = pl.BlockSpec((TM, input_dim), lambda i: (i, 0))
    y_spec = pl.BlockSpec((TM, 1), lambda i: (i, 0))
    out_spec = pl.BlockSpec((TM, 1), lambda i: (i, 0))
    # Weights/biases: constant block index -> DMA'd once, VMEM-resident.
    def resident(shape):
        return pl.BlockSpec(shape, lambda i: (0, 0))
    # Per-tile loss partial sum as an SMEM scalar.
    loss_spec = pl.BlockSpec((1, 1), lambda i: (i, 0),
                             memory_space=pltpu.MemorySpace.SMEM)

    out_pad, partial = pl.pallas_call(
        functools.partial(_saplma_kernel, batch=B),
        grid=(num_tiles,),
        in_specs=[
            x_spec, y_spec,
            resident(w1.shape), resident(b1.shape),
            resident(w2.shape), resident(b2.shape),
            resident(w3.shape), resident(b3.shape),
            resident(w4.shape), resident(b4.shape),
        ],
        out_specs=(out_spec, loss_spec),
        out_shape=(
            jax.ShapeDtypeStruct((B_pad, 1), jnp.float32),      # sigmoid output
            jax.ShapeDtypeStruct((num_tiles, 1), jnp.float32),  # per-tile loss sums
        ),
        compiler_params=pltpu.CompilerParams(
            dimension_semantics=("parallel",)),
    )(state, label, w1, b1, w2, b2, w3, b3, w4, b4)

    out = out_pad[:B] if B_pad != B else out_pad
    loss = jnp.sum(partial) / jnp.float32(B)
    return out, loss


def init_params(key, input_dim=2304):
    """PyTorch-style init U(-1/sqrt(fan_in), 1/sqrt(fan_in)).

    w1..w3 stored transposed (in, out) in bfloat16 (HBM-traffic win);
    w4 stored as a (1, 64) float32 row (used on the VPU); biases (1, out) f32.
    """
    dims = [input_dim, 256, 128, 64, 1]
    params = []
    for i in range(4):
        fan_in, fan_out = dims[i], dims[i + 1]
        key, kw, kb = jax.random.split(key, 3)
        bound = 1.0 / jnp.sqrt(jnp.float32(fan_in))
        w = jax.random.uniform(kw, (fan_in, fan_out), jnp.float32, -bound, bound)
        b = jax.random.uniform(kb, (1, fan_out), jnp.float32, -bound, bound)
        if i < 3:
            w = w.astype(jnp.bfloat16)
        else:
            w = w.reshape(1, fan_in)  # (1, 64) row for the VPU reduction
        params.append((w, b))
    return params


def reference_forward(state, label, params):
    """Pure-JAX reference mirroring the kernel's bf16-weight numerics."""
    (w1, b1), (w2, b2), (w3, b3), (w4, b4) = params
    h = jnp.dot(state.astype(jnp.bfloat16), w1,
                preferred_element_type=jnp.float32) + b1
    h = jnp.maximum(h, 0.0)
    h = jnp.dot(h.astype(jnp.bfloat16), w2,
                preferred_element_type=jnp.float32) + b2
    h = jnp.maximum(h, 0.0)
    h = jnp.dot(h.astype(jnp.bfloat16), w3,
                preferred_element_type=jnp.float32) + b3
    h = jnp.maximum(h, 0.0)
    logits = jnp.sum(h * w4, axis=-1, keepdims=True) + b4
    out = 1.0 / (1.0 + jnp.exp(-logits))
    log_p = jnp.maximum(jnp.log(out), -100.0)
    log_1mp = jnp.maximum(jnp.log(1.0 - out), -100.0)
    loss = jnp.mean(-(label * log_p + (1.0 - label) * log_1mp))
    return out, loss


if __name__ == "__main__":
    INPUT_DIM = 2304   # module default
    B = 8              # small batch

    key = jax.random.PRNGKey(0)
    k_params, k_state, k_label = jax.random.split(key, 3)

    params = init_params(k_params, INPUT_DIM)
    state = jax.random.normal(k_state, (B, INPUT_DIM), jnp.float32)
    label = jax.random.bernoulli(k_label, 0.5, (B, 1)).astype(jnp.float32)

    out, loss = saplma_forward(state, label, params)
    jax.block_until_ready((out, loss))

    # sanity check against pure-JAX reference (same bf16 weight numerics)
    ref_out, ref_loss = reference_forward(state, label, params)
    assert out.shape == (B, 1)
    assert jnp.allclose(out, ref_out, atol=1e-3, rtol=1e-3)
    assert jnp.allclose(loss, ref_loss, atol=1e-3, rtol=1e-3)

    print("KERNEL_OK")
</pallas_src>

<mosaic_0001>
module attributes {stable_mosaic.version = 11 : i64} {
  func.func @_saplma_kernel(%arg0: i32, %arg1: memref<8x2304xf32, #tpu.memory_space<vmem>>, %arg2: memref<8x1xf32, #tpu.memory_space<vmem>>, %arg3: memref<2304x256xbf16, #tpu.memory_space<vmem>>, %arg4: memref<1x256xf32, #tpu.memory_space<vmem>>, %arg5: memref<256x128xbf16, #tpu.memory_space<vmem>>, %arg6: memref<1x128xf32, #tpu.memory_space<vmem>>, %arg7: memref<128x64xbf16, #tpu.memory_space<vmem>>, %arg8: memref<1x64xf32, #tpu.memory_space<vmem>>, %arg9: memref<1x64xf32, #tpu.memory_space<vmem>>, %arg10: memref<1x1xf32, #tpu.memory_space<vmem>>, %arg11: memref<8x1xf32, #tpu.memory_space<vmem>>, %arg12: memref<1x1xf32, #tpu.memory_space<smem>>) attributes {dimension_semantics = [#tpu.dimension_semantics<parallel>], iteration_bounds = array<i64: 1>, scalar_prefetch = 0 : i64, scratch_operands = 0 : i64, tpu.core_type = #tpu.core_type<tc>, window_params = [{transform_indices = @transform_0, window_bounds = array<i64: 8, 2304>}, {transform_indices = @transform_1, window_bounds = array<i64: 8, 1>}, {pipeline_mode = #tpu.pipeline_mode<synchronous>, transform_indices = @transform_2, window_bounds = array<i64: 2304, 256>}, {pipeline_mode = #tpu.pipeline_mode<synchronous>, transform_indices = @transform_3, window_bounds = array<i64: 1, 256>}, {pipeline_mode = #tpu.pipeline_mode<synchronous>, transform_indices = @transform_4, window_bounds = array<i64: 256, 128>}, {pipeline_mode = #tpu.pipeline_mode<synchronous>, transform_indices = @transform_5, window_bounds = array<i64: 1, 128>}, {pipeline_mode = #tpu.pipeline_mode<synchronous>, transform_indices = @transform_6, window_bounds = array<i64: 128, 64>}, {pipeline_mode = #tpu.pipeline_mode<synchronous>, transform_indices = @transform_7, window_bounds = array<i64: 1, 64>}, {pipeline_mode = #tpu.pipeline_mode<synchronous>, transform_indices = @transform_8, window_bounds = array<i64: 1, 64>}, {pipeline_mode = #tpu.pipeline_mode<synchronous>, transform_indices = @transform_9, window_bounds = array<i64: 1, 1>}, {transform_indices = @transform_10, window_bounds = array<i64: 8, 1>}, {transform_indices = @transform_11, window_bounds = array<i64: 1, 1>}]} {
    %c0 = arith.constant 0 : index
    %c0_0 = arith.constant 0 : index
    %0 = vector.load %arg1[%c0, %c0_0] : memref<8x2304xf32, #tpu.memory_space<vmem>>, vector<8x2304xf32>
    %1 = arith.truncf %0 : vector<8x2304xf32> to vector<8x2304xbf16>
    %c0_1 = arith.constant 0 : index
    %c0_2 = arith.constant 0 : index
    %2 = vector.load %arg3[%c0_1, %c0_2] : memref<2304x256xbf16, #tpu.memory_space<vmem>>, vector<2304x256xbf16>
    %cst = arith.constant dense<0.000000e+00> : vector<8x256xf32>
    %3 = tpu.matmul %1, %2, %cst {dimension_numbers = #tpu.dot_dimension_numbers<[1], [0], [0], [1], [0, 0, 1, 1], [], []>} : vector<8x2304xbf16>, vector<2304x256xbf16>, vector<8x256xf32> -> vector<8x256xf32>
    %c0_3 = arith.constant 0 : index
    %c0_4 = arith.constant 0 : index
    %4 = vector.load %arg4[%c0_3, %c0_4] : memref<1x256xf32, #tpu.memory_space<vmem>>, vector<1x256xf32>
    %5 = vector.broadcast %4 : vector<1x256xf32> to vector<8x256xf32>
    %6 = arith.addf %3, %5 : vector<8x256xf32>
    %cst_5 = arith.constant 0.000000e+00 : f32
    %7 = vector.broadcast %cst_5 : f32 to vector<8x256xf32>
    %8 = arith.maximumf %6, %7 : vector<8x256xf32>
    %9 = arith.truncf %8 : vector<8x256xf32> to vector<8x256xbf16>
    %c0_6 = arith.constant 0 : index
    %c0_7 = arith.constant 0 : index
    %10 = vector.load %arg5[%c0_6, %c0_7] : memref<256x128xbf16, #tpu.memory_space<vmem>>, vector<256x128xbf16>
    %cst_8 = arith.constant dense<0.000000e+00> : vector<8x128xf32>
    %11 = tpu.matmul %9, %10, %cst_8 {dimension_numbers = #tpu.dot_dimension_numbers<[1], [0], [0], [1], [0, 0, 1, 1], [], []>} : vector<8x256xbf16>, vector<256x128xbf16>, vector<8x128xf32> -> vector<8x128xf32>
    %c0_9 = arith.constant 0 : index
    %c0_10 = arith.constant 0 : index
    %12 = vector.load %arg6[%c0_9, %c0_10] : memref<1x128xf32, #tpu.memory_space<vmem>>, vector<1x128xf32>
    %13 = vector.broadcast %12 : vector<1x128xf32> to vector<8x128xf32>
    %14 = arith.addf %11, %13 : vector<8x128xf32>
    %cst_11 = arith.constant 0.000000e+00 : f32
    %15 = vector.broadcast %cst_11 : f32 to vector<8x128xf32>
    %16 = arith.maximumf %14, %15 : vector<8x128xf32>
    %17 = arith.truncf %16 : vector<8x128xf32> to vector<8x128xbf16>
    %c0_12 = arith.constant 0 : index
    %c0_13 = arith.constant 0 : index
    %18 = vector.load %arg7[%c0_12, %c0_13] : memref<128x64xbf16, #tpu.memory_space<vmem>>, vector<128x64xbf16>
    %cst_14 = arith.constant dense<0.000000e+00> : vector<8x64xf32>
    %19 = tpu.matmul %17, %18, %cst_14 {dimension_numbers = #tpu.dot_dimension_numbers<[1], [0], [0], [1], [0, 0, 1, 1], [], []>} : vector<8x128xbf16>, vector<128x64xbf16>, vector<8x64xf32> -> vector<8x64xf32>
    %c0_15 = arith.constant 0 : index
    %c0_16 = arith.constant 0 : index
    %20 = vector.load %arg8[%c0_15, %c0_16] : memref<1x64xf32, #tpu.memory_space<vmem>>, vector<1x64xf32>
    %21 = vector.broadcast %20 : vector<1x64xf32> to vector<8x64xf32>
    %22 = arith.addf %19, %21 : vector<8x64xf32>
    %cst_17 = arith.constant 0.000000e+00 : f32
    %23 = vector.broadcast %cst_17 : f32 to vector<8x64xf32>
    %24 = arith.maximumf %22, %23 : vector<8x64xf32>
    %c0_18 = arith.constant 0 : index
    %c0_19 = arith.constant 0 : index
    %25 = vector.load %arg9[%c0_18, %c0_19] : memref<1x64xf32, #tpu.memory_space<vmem>>, vector<1x64xf32>
    %26 = vector.broadcast %25 : vector<1x64xf32> to vector<8x64xf32>
    %27 = arith.mulf %24, %26 : vector<8x64xf32>
    %cst_20 = arith.constant dense<0.000000e+00> : vector<8xf32>
    %28 = vector.multi_reduction <add>, %27, %cst_20 [1] : vector<8x64xf32> to vector<8xf32>
    %29 = vector.shape_cast %28 : vector<8xf32> to vector<8x1xf32>
    %c0_21 = arith.constant 0 : index
    %c0_22 = arith.constant 0 : index
    %30 = vector.load %arg10[%c0_21, %c0_22] : memref<1x1xf32, #tpu.memory_space<vmem>>, vector<1x1xf32>
    %31 = vector.broadcast %30 : vector<1x1xf32> to vector<8x1xf32>
    %32 = arith.addf %29, %31 : vector<8x1xf32>
    %cst_23 = arith.constant 0.000000e+00 : f32
    %33 = vector.broadcast %cst_23 : f32 to vector<8x1xf32>
    %34 = arith.subf %33, %32 : vector<8x1xf32>
    %35 = math.exp %34 : vector<8x1xf32>
    %cst_24 = arith.constant 1.000000e+00 : f32
    %36 = vector.broadcast %cst_24 : f32 to vector<8x1xf32>
    %37 = arith.addf %36, %35 : vector<8x1xf32>
    %cst_25 = arith.constant 1.000000e+00 : f32
    %38 = vector.broadcast %cst_25 : f32 to vector<8x1xf32>
    %39 = arith.divf %38, %37 : vector<8x1xf32>
    %c0_26 = arith.constant 0 : index
    %c0_27 = arith.constant 0 : index
    %40 = vector.load %arg11[%c0_26, %c0_27] : memref<8x1xf32, #tpu.memory_space<vmem>>, vector<8x1xf32>
    tpu.vector_store %arg11[%c0_26, %c0_27], %39 {strides = array<i32>} : memref<8x1xf32, #tpu.memory_space<vmem>>, vector<8x1xf32>,
    %c0_28 = arith.constant 0 : index
    %c0_29 = arith.constant 0 : index
    %41 = vector.load %arg2[%c0_28, %c0_29] : memref<8x1xf32, #tpu.memory_space<vmem>>, vector<8x1xf32>
    %42 = math.log %39 : vector<8x1xf32>
    %cst_30 = arith.constant -1.000000e+02 : f32
    %43 = vector.broadcast %cst_30 : f32 to vector<8x1xf32>
    %44 = arith.maximumf %42, %43 : vector<8x1xf32>
    %cst_31 = arith.constant 1.000000e+00 : f32
    %45 = vector.broadcast %cst_31 : f32 to vector<8x1xf32>
    %46 = arith.subf %45, %39 : vector<8x1xf32>
    %47 = math.log %46 : vector<8x1xf32>
    %cst_32 = arith.constant -1.000000e+02 : f32
    %48 = vector.broadcast %cst_32 : f32 to vector<8x1xf32>
    %49 = arith.maximumf %47, %48 : vector<8x1xf32>
    %50 = arith.mulf %41, %44 : vector<8x1xf32>
    %cst_33 = arith.constant 1.000000e+00 : f32
    %51 = vector.broadcast %cst_33 : f32 to vector<8x1xf32>
    %52 = arith.subf %51, %41 : vector<8x1xf32>
    %53 = arith.mulf %52, %49 : vector<8x1xf32>
    %54 = arith.addf %50, %53 : vector<8x1xf32>
    %cst_34 = arith.constant 0.000000e+00 : f32
    %55 = vector.broadcast %cst_34 : f32 to vector<8x1xf32>
    %56 = arith.subf %55, %54 : vector<8x1xf32>
    %c8_i32 = arith.constant 8 : i32
    %57 = arith.muli %arg0, %c8_i32 : i32
    %58 = tpu.iota {dimensions = array<i32: 0>} : vector<8x1xi32>
    %59 = vector.broadcast %57 : i32 to vector<8x1xi32>
    %60 = arith.addi %59, %58 : vector<8x1xi32>
    %c8_i32_35 = arith.constant 8 : i32
    %61 = vector.broadcast %c8_i32_35 : i32 to vector<8x1xi32>
    %62 = arith.cmpi slt, %60, %61 : vector<8x1xi32>
    %cst_36 = arith.constant 0.000000e+00 : f32
    %63 = vector.broadcast %cst_36 : f32 to vector<8x1xf32>
    %64 = arith.select %62, %56, %63 : vector<8x1xi1>, vector<8x1xf32>
    %65 = vector.shape_cast %64 : vector<8x1xf32> to vector<1x8x1xf32>
    %cst_37 = arith.constant dense<0.000000e+00> : vector<1xf32>
    %66 = vector.multi_reduction <add>, %65, %cst_37 [1, 2] : vector<1x8x1xf32> to vector<1xf32>
    %67 = vector.shape_cast %66 : vector<1xf32> to vector<1x1x1xf32>
    %68 = vector.extract %67[0, 0, 0] : f32 from vector<1x1x1xf32>
    %c0_38 = arith.constant 0 : index
    %c0_39 = arith.constant 0 : index
    %69 = memref.load %arg12[%c0_38, %c0_39] : memref<1x1xf32, #tpu.memory_space<smem>>
    memref.store %68, %arg12[%c0_38, %c0_39] : memref<1x1xf32, #tpu.memory_space<smem>>
    return
  }
  func.func @transform_0(%arg0: i32) -> (i32, i32) {
    %c0_i32 = arith.constant 0 : i32
    %c0_i32_0 = arith.constant 0 : i32
    return %arg0, %c0_i32 : i32, i32
  }
  func.func @transform_1(%arg0: i32) -> (i32, i32) {
    %c0_i32 = arith.constant 0 : i32
    %c0_i32_0 = arith.constant 0 : i32
    return %arg0, %c0_i32 : i32, i32
  }
  func.func @transform_2(%arg0: i32) -> (i32, i32) {
    %c0_i32 = arith.constant 0 : i32
    %c0_i32_0 = arith.constant 0 : i32
    %c0_i32_1 = arith.constant 0 : i32
    return %c0_i32, %c0_i32_0 : i32, i32
  }
  func.func @transform_3(%arg0: i32) -> (i32, i32) {
    %c0_i32 = arith.constant 0 : i32
    %c0_i32_0 = arith.constant 0 : i32
    %c0_i32_1 = arith.constant 0 : i32
    return %c0_i32, %c0_i32_0 : i32, i32
  }
  func.func @transform_4(%arg0: i32) -> (i32, i32) {
    %c0_i32 = arith.constant 0 : i32
    %c0_i32_0 = arith.constant 0 : i32
    %c0_i32_1 = arith.constant 0 : i32
    return %c0_i32, %c0_i32_0 : i32, i32
  }
  func.func @transform_5(%arg0: i32) -> (i32, i32) {
    %c0_i32 = arith.constant 0 : i32
    %c0_i32_0 = arith.constant 0 : i32
    %c0_i32_1 = arith.constant 0 : i32
    return %c0_i32, %c0_i32_0 : i32, i32
  }
  func.func @transform_6(%arg0: i32) -> (i32, i32) {
    %c0_i32 = arith.constant 0 : i32
    %c0_i32_0 = arith.constant 0 : i32
    %c0_i32_1 = arith.constant 0 : i32
    return %c0_i32, %c0_i32_0 : i32, i32
  }
  func.func @transform_7(%arg0: i32) -> (i32, i32) {
    %c0_i32 = arith.constant 0 : i32
    %c0_i32_0 = arith.constant 0 : i32
    %c0_i32_1 = arith.constant 0 : i32
    return %c0_i32, %c0_i32_0 : i32, i32
  }
  func.func @transform_8(%arg0: i32) -> (i32, i32) {
    %c0_i32 = arith.constant 0 : i32
    %c0_i32_0 = arith.constant 0 : i32
    %c0_i32_1 = arith.constant 0 : i32
    return %c0_i32, %c0_i32_0 : i32, i32
  }
  func.func @transform_9(%arg0: i32) -> (i32, i32) {
    %c0_i32 = arith.constant 0 : i32
    %c0_i32_0 = arith.constant 0 : i32
    %c0_i32_1 = arith.constant 0 : i32
    return %c0_i32, %c0_i32_0 : i32, i32
  }
  func.func @transform_10(%arg0: i32) -> (i32, i32) {
    %c0_i32 = arith.constant 0 : i32
    %c0_i32_0 = arith.constant 0 : i32
    return %arg0, %c0_i32 : i32, i32
  }
  func.func @transform_11(%arg0: i32) -> (i32, i32) {
    %c0_i32 = arith.constant 0 : i32
    %c0_i32_0 = arith.constant 0 : i32
    return %arg0, %c0_i32 : i32, i32
  }
}

</mosaic_0001>

<llo_original>
// kernel: tpu_custom_call.1
$region0: #{tpu_custom_call.1}
  #allocation0 [shape = 'u32[]', space=smem, size = 0x4, offset = 0x4, fixed_abs, tag = 'smem constant byte address 0x4 - core index']
  #allocation1 [shape = 'u32[72,128]{1,0:T(1,128)}', space=vmem, size = 0x9000, scoped, tag = 'internal scratch']
  #allocation2 [shape = 'f32[1,1]{1,0:T(1,128)S(1)}', space=vmem, size = 0x200, scoped, tag = 'scoped memory for tpu_custom_call.1']
  %s0 = inlined_call_operand.hbm [shape: f32[8,2304], index: 0, kind: input, shape index: {}]
  %s1 = inlined_call_operand.vmem [shape: f32[8,1], index: 1, kind: input, shape index: {}]
  %s2 = inlined_call_operand.hbm [shape: bf16[2304,256], index: 2, kind: input, shape index: {}]
  %s3 = inlined_call_operand.hbm [shape: f32[1,256], index: 3, kind: input, shape index: {}]
  %s4 = inlined_call_operand.hbm [shape: bf16[256,128], index: 4, kind: input, shape index: {}]
  %s5 = inlined_call_operand.hbm [shape: f32[1,128], index: 5, kind: input, shape index: {}]
  %s6 = inlined_call_operand.vmem [shape: bf16[128,64], index: 6, kind: input, shape index: {}]
  %s7 = inlined_call_operand.hbm [shape: f32[1,64], index: 7, kind: input, shape index: {}]
  %s8 = inlined_call_operand.hbm [shape: f32[1,64], index: 8, kind: input, shape index: {}]
  %s9 = inlined_call_operand.<no memory space> [shape: f32[1,1], index: 9, kind: input, shape index: {}]
  %s10 = inlined_call_operand.vmem [shape: f32[8,1], index: 10, kind: output, shape index: {0}]
  %s11 = inlined_call_operand.hbm [shape: f32[1,1], index: 11, kind: output, shape index: {1}]
  %12 = xla_tuple %s10, %s11
  %s13 = sld [smem:[#allocation0]]
  $region86: #{tpu_custom_call.1} parent=0
    _
  %s15 = ssub.s32 1, %s13
  %s16 = scalar_select 0, %s15, %s13
  %v17 = vstv %s9
  %18 = vst [vmem:[#allocation2] sm:$0x1] %v17
  $region1: #{tpu_custom_call.1} parent=0
    #allocation3 [shape = 'u8[73728]{0}', space=vmem, size = 0x12000, scoped, tag = 'input window, operand 0, single buffered']
    #allocation4 [shape = 's32[1]{0}', space=sflag, size = 0x4, scoped, tag = 'scoped memory for tpu_custom_call.1']
    #allocation5 [shape = 's32[1]{0}', space=sflag, size = 0x4, scoped, tag = 'scoped memory for tpu_custom_call.1']
    #allocation6 [shape = 'u8[1179648]{0}', space=vmem, size = 0x120000, scoped, tag = 'input window, operand 2, single buffered']
    #allocation7 [shape = 's32[1]{0}', space=sflag, size = 0x4, scoped, tag = 'scoped memory for tpu_custom_call.1']
    #allocation8 [shape = 'u8[1024]{0}', space=vmem, size = 0x400, scoped, tag = 'input window, operand 3, single buffered']
    #allocation9 [shape = 'u8[65536]{0}', space=vmem, size = 0x10000, scoped, tag = 'input window, operand 4, single buffered']
    #allocation10 [shape = 's32[1]{0}', space=sflag, size = 0x4, scoped, tag = 'scoped memory for tpu_custom_call.1']
    #allocation11 [shape = 'u8[512]{0}', space=vmem, size = 0x400, scoped, tag = 'input window, operand 5, single buffered']
    #allocation12 [shape = 'u8[512]{0}', space=vmem, size = 0x400, scoped, tag = 'input window, operand 7, single buffered']
    #allocation13 [shape = 's32[1]{0}', space=sflag, size = 0x4, scoped, tag = 'scoped memory for tpu_custom_call.1']
    #allocation14 [shape = 'u8[512]{0}', space=vmem, size = 0x400, scoped, tag = 'input window, operand 8, single buffered']
    #allocation15 [shape = 'u8[512]{0}', space=smem, size = 0x200, scoped, tag = 'output window, operand 1, single buffered']
    %19 = vsyncpa [#allocation4], 0
    %20 = vsyncpa [#allocation7], 0
    %21 = vsyncpa [#allocation10], 0
    %22 = vsyncpa [#allocation13], 0
    %23 = vsyncpa [#allocation5], 0
    // Predicated region
    $region2: #{tpu_custom_call.1} parent=1 // pred_check
      _
    $region3: #{tpu_custom_call.1} parent=1 // pred_check_branch
      %25 = sbr.rel (0) target = $region5
    $region4: #{tpu_custom_call.1} parent=1 // pred_region
      %27 = vsyncadd [#allocation4], 0
      %s29 = sshll.u32 %s0, 4
      %s30 = int_to_ptr.hbm [resolvable:$true] %s29
      %s31 = sshll.u32 [#allocation3], 4
      %s32 = int_to_ptr.vmem [resolvable:$true] %s31
      %34 = dma.hbm_to_vmem [thread:$0]  %s30, 2304, %s32, [#allocation4]
    $region5: #{tpu_custom_call.1} parent=1 // pred_fallthru
      _
    // Predicated region
    $region6: #{tpu_custom_call.1} parent=1 // pred_check
      _
    $region7: #{tpu_custom_call.1} parent=1 // pred_check_branch
      %36 = sbr.rel (0) target = $region9
    $region8: #{tpu_custom_call.1} parent=1 // pred_region
      _
    $region9: #{tpu_custom_call.1} parent=1 // pred_fallthru
      _
    // Predicated region
    $region10: #{tpu_custom_call.1} parent=1 // pred_check
      _
    $region11: #{tpu_custom_call.1} parent=1 // pred_check_branch
      %38 = sbr.rel (0) target = $region13
    $region12: #{tpu_custom_call.1} parent=1 // pred_region
      %40 = vsyncadd [#allocation7], 0
      %s41 = sshll.u32 %s2, 4
      %s42 = int_to_ptr.hbm [resolvable:$true] %s41
      %s43 = sshll.u32 [#allocation6], 4
      %s44 = int_to_ptr.vmem [resolvable:$true] %s43
      %49 = dma.hbm_to_vmem [thread:$0]  %s42, 36864, %s44, [#allocation7], 128, 128, 8
    $region13: #{tpu_custom_call.1} parent=1 // pred_fallthru
      _
    // Predicated region
    $region14: #{tpu_custom_call.1} parent=1 // pred_check
      _
    $region15: #{tpu_custom_call.1} parent=1 // pred_check_branch
      %51 = sbr.rel (0) target = $region17
    $region16: #{tpu_custom_call.1} parent=1 // pred_region
      %53 = vsyncadd [#allocation7], 0
      %s55 = sshll.u32 %s3, 4
      %s56 = int_to_ptr.hbm [resolvable:$true] %s55
      %s57 = sshll.u32 [#allocation8], 4
      %s58 = int_to_ptr.vmem [resolvable:$true] %s57
      %60 = dma.hbm_to_vmem [thread:$0]  %s56, 32, %s58, [#allocation7]
    $region17: #{tpu_custom_call.1} parent=1 // pred_fallthru
      _
    // Predicated region
    $region18: #{tpu_custom_call.1} parent=1 // pred_check
      _
    $region19: #{tpu_custom_call.1} parent=1 // pred_check_branch
      %62 = sbr.rel (0) target = $region21
    $region20: #{tpu_custom_call.1} parent=1 // pred_region
      %64 = vsyncadd [#allocation10], 0
      %s65 = sshll.u32 %s4, 4
      %s66 = int_to_ptr.hbm [resolvable:$true] %s65
      %s67 = sshll.u32 [#allocation9], 4
      %s68 = int_to_ptr.vmem [resolvable:$true] %s67
      %73 = dma.hbm_to_vmem [thread:$0]  %s66, 2048, %s68, [#allocation10], 64, 64, 4
    $region21: #{tpu_custom_call.1} parent=1 // pred_fallthru
      _
    // Predicated region
    $region22: #{tpu_custom_call.1} parent=1 // pred_check
      _
    $region23: #{tpu_custom_call.1} parent=1 // pred_check_branch
      %75 = sbr.rel (0) target = $region25
    $region24: #{tpu_custom_call.1} parent=1 // pred_region
      %77 = vsyncadd [#allocation10], 0
      %s79 = sshll.u32 %s5, 4
      %s80 = int_to_ptr.hbm [resolvable:$true] %s79
      %s81 = sshll.u32 [#allocation11], 4
      %s82 = int_to_ptr.vmem [resolvable:$true] %s81
      %84 = dma.hbm_to_vmem [thread:$0]  %s80, 16, %s82, [#allocation10]
    $region25: #{tpu_custom_call.1} parent=1 // pred_fallthru
      _
    // Predicated region
    $region26: #{tpu_custom_call.1} parent=1 // pred_check
      _
    $region27: #{tpu_custom_call.1} parent=1 // pred_check_branch
      %86 = sbr.rel (0) target = $region29
    $region28: #{tpu_custom_call.1} parent=1 // pred_region
      _
    $region29: #{tpu_custom_call.1} parent=1 // pred_fallthru
      _
    // Predicated region
    $region30: #{tpu_custom_call.1} parent=1 // pred_check
      _
    $region31: #{tpu_custom_call.1} parent=1 // pred_check_branch
      %88 = sbr.rel (0) target = $region33
    $region32: #{tpu_custom_call.1} parent=1 // pred_region
      %90 = vsyncadd [#allocation13], 0
      %s92 = sshll.u32 %s7, 4
      %s93 = int_to_ptr.hbm [resolvable:$true] %s92
      %s94 = sshll.u32 [#allocation12], 4
      %s95 = int_to_ptr.vmem [resolvable:$true] %s94
      %97 = dma.hbm_to_vmem [thread:$0]  %s93, 16, %s95, [#allocation13]
    $region33: #{tpu_custom_call.1} parent=1 // pred_fallthru
      _
    // Predicated region
    $region34: #{tpu_custom_call.1} parent=1 // pred_check
      _
    $region35: #{tpu_custom_call.1} parent=1 // pred_check_branch
      %99 = sbr.rel (0) target = $region37
    $region36: #{tpu_custom_call.1} parent=1 // pred_region
      %101 = vsyncadd [#allocation13], 0
      %s103 = sshll.u32 %s8, 4
      %s104 = int_to_ptr.hbm [resolvable:$true] %s103
      %s105 = sshll.u32 [#allocation14], 4
      %s106 = int_to_ptr.vmem [resolvable:$true] %s105
      %108 = dma.hbm_to_vmem [thread:$0]  %s104, 16, %s106, [#allocation13]
    $region37: #{tpu_custom_call.1} parent=1 // pred_fallthru
      _
    // Predicated region
    $region38: #{tpu_custom_call.1} parent=1 // pred_check
      _
    $region39: #{tpu_custom_call.1} parent=1 // pred_check_branch
      %110 = sbr.rel (0) target = $region41
    $region40: #{tpu_custom_call.1} parent=1 // pred_region
      _
    $region41: #{tpu_custom_call.1} parent=1 // pred_fallthru
      _
    // Predicated region
    $region42: #{tpu_custom_call.1} parent=1 // pred_check
      _
    $region43: #{tpu_custom_call.1} parent=1 // pred_check_branch
      %112 = sbr.rel (0) target = $region45
    $region44: #{tpu_custom_call.1} parent=1 // pred_region
      %114 = dma.done [#allocation4], 2304
    $region45: #{tpu_custom_call.1} parent=1 // pred_fallthru
      _
    // Predicated region
    $region46: #{tpu_custom_call.1} parent=1 // pred_check
      _
    $region47: #{tpu_custom_call.1} parent=1 // pred_check_branch
      %116 = sbr.rel (0) target = $region49
    $region48: #{tpu_custom_call.1} parent=1 // pred_region
      %118 = dma.done [#allocation7], 36864
    $region49: #{tpu_custom_call.1} parent=1 // pred_fallthru
      _
    // Predicated region
    $region50: #{tpu_custom_call.1} parent=1 // pred_check
      _
    $region51: #{tpu_custom_call.1} parent=1 // pred_check_branch
      %120 = sbr.rel (0) target = $region53
    $region52: #{tpu_custom_call.1} parent=1 // pred_region
      %122 = dma.done [#allocation7], 32
    $region53: #{tpu_custom_call.1} parent=1 // pred_fallthru
      _
    // Predicated region
    $region54: #{tpu_custom_call.1} parent=1 // pred_check
      _
    $region55: #{tpu_custom_call.1} parent=1 // pred_check_branch
      %124 = sbr.rel (0) target = $region57
    $region56: #{tpu_custom_call.1} parent=1 // pred_region
      %126 = dma.done [#allocation10], 2048
    $region57: #{tpu_custom_call.1} parent=1 // pred_fallthru
      _
    // Predicated region
    $region58: #{tpu_custom_call.1} parent=1 // pred_check
      _
    $region59: #{tpu_custom_call.1} parent=1 // pred_check_branch
      %128 = sbr.rel (0) target = $region61
    $region60: #{tpu_custom_call.1} parent=1 // pred_region
      %130 = dma.done [#allocation10], 16
    $region61: #{tpu_custom_call.1} parent=1 // pred_fallthru
      _
    // Predicated region
    $region62: #{tpu_custom_call.1} parent=1 // pred_check
      _
    $region63: #{tpu_custom_call.1} parent=1 // pred_check_branch
      %132 = sbr.rel (0) target = $region65
    $region64: #{tpu_custom_call.1} parent=1 // pred_region
      %134 = dma.done [#allocation13], 16
    $region65: #{tpu_custom_call.1} parent=1 // pred_fallthru
      _
    // Predicated region
    $region66: #{tpu_custom_call.1} parent=1 // pred_check
      _
    $region67: #{tpu_custom_call.1} parent=1 // pred_check_branch
      %136 = sbr.rel (0) target = $region69
    $region68: #{tpu_custom_call.1} parent=1 // pred_region
      %138 = dma.done [#allocation13], 16
    $region69: #{tpu_custom_call.1} parent=1 // pred_fallthru
      _
    %v139 = vld [vmem:[#allocation3] sm:$0xff]
    %v140 = vld [vmem:[#allocation3 + $0x8] sm:$0xff]
    %v141 = vld [vmem:[#allocation3 + $0x10] sm:$0xff]
    %v142 = vld [vmem:[#allocation3 + $0x18] sm:$0xff]
    %v143 = vld [vmem:[#allocation3 + $0x20] sm:$0xff]
    %v144 = vld [vmem:[#allocation3 + $0x28] sm:$0xff]
    %v145 = vld [vmem:[#allocation3 + $0x30] sm:$0xff]
    %v146 = vld [vmem:[#allocation3 + $0x38] sm:$0xff]
    %v147 = vld [vmem:[#allocation3 + $0x40] sm:$0xff]
    %v148 = vld [vmem:[#allocation3 + $0x48] sm:$0xff]
    %v149 = vld [vmem:[#allocation3 + $0x50] sm:$0xff]
    %v150 = vld [vmem:[#allocation3 + $0x58] sm:$0xff]
    %v151 = vld [vmem:[#allocation3 + $0x60] sm:$0xff]
    %v152 = vld [vmem:[#allocation3 + $0x68] sm:$0xff]
    %v153 = vld [vmem:[#allocation3 + $0x70] sm:$0xff]
    %v154 = vld [vmem:[#allocation3 + $0x78] sm:$0xff]
    %v155 = vld [vmem:[#allocation3 + $0x80] sm:$0xff]
    %v156 = vld [vmem:[#allocation3 + $0x88] sm:$0xff]
    %v157 = vpack.c.bf16 %v139, %v139
    %v158 = vpack.c.bf16 %v140, %v140
    %v159 = vpack.c.bf16 %v141, %v141
    %v160 = vpack.c.bf16 %v142, %v142
    %v161 = vpack.c.bf16 %v143, %v143
    %v162 = vpack.c.bf16 %v144, %v144
    %v163 = vpack.c.bf16 %v145, %v145
    %v164 = vpack.c.bf16 %v146, %v146
    %v165 = vpack.c.bf16 %v147, %v147
    %v166 = vpack.c.bf16 %v148, %v148
    %v167 = vpack.c.bf16 %v149, %v149
    %v168 = vpack.c.bf16 %v150, %v150
    %v169 = vpack.c.bf16 %v151, %v151
    %v170 = vpack.c.bf16 %v152, %v152
    %v171 = vpack.c.bf16 %v153, %v153
    %v172 = vpack.c.bf16 %v154, %v154
    %v173 = vpack.c.bf16 %v155, %v155
    %v174 = vpack.c.bf16 %v156, %v156
    %v175 = vld [vmem:[#allocation6] sm:$0xff]
    %v176 = vld [vmem:[#allocation6 + $0x8] sm:$0xff]
    %v177 = vld [vmem:[#allocation6 + $0x10] sm:$0xff]
    %v178 = vld [vmem:[#allocation6 + $0x18] sm:$0xff]
    %v179 = vld [vmem:[#allocation6 + $0x20] sm:$0xff]
    %v180 = vld [vmem:[#allocation6 + $0x28] sm:$0xff]
    %v181 = vld [vmem:[#allocation6 + $0x30] sm:$0xff]
    %v182 = vld [vmem:[#allocation6 + $0x38] sm:$0xff]
    %v183 = vld [vmem:[#allocation6 + $0x40] sm:$0xff]
    %v184 = vld [vmem:[#allocation6 + $0x48] sm:$0xff]
    %v185 = vld [vmem:[#allocation6 + $0x50] sm:$0xff]
    %v186 = vld [vmem:[#allocation6 + $0x58] sm:$0xff]
    %v187 = vld [vmem:[#allocation6 + $0x60] sm:$0xff]
    %v188 = vld [vmem:[#allocation6 + $0x68] sm:$0xff]
    %v189 = vld [vmem:[#allocation6 + $0x70] sm:$0xff]
    %v190 = vld [vmem:[#allocation6 + $0x78] sm:$0xff]
    %v191 = vld [vmem:[#allocation6 + $0x80] sm:$0xff]
    %v192 = vld [vmem:[#allocation6 + $0x88] sm:$0xff]
    %v193 = vld [vmem:[#allocation6 + $0x90] sm:$0xff]
    %v194 = vld [vmem:[#allocation6 + $0x98] sm:$0xff]
    %v195 = vld [vmem:[#allocation6 + $0xa0] sm:$0xff]
    %v196 = vld [vmem:[#allocation6 + $0xa8] sm:$0xff]
    %v197 = vld [vmem:[#allocation6 + $0xb0] sm:$0xff]
    %v198 = vld [vmem:[#allocation6 + $0xb8] sm:$0xff]
    %v199 = vld [vmem:[#allocation6 + $0xc0] sm:$0xff]
    %v200 = vld [vmem:[#allocation6 + $0xc8] sm:$0xff]
    %v201 = vld [vmem:[#allocation6 + $0xd0] sm:$0xff]
    %v202 = vld [vmem:[#allocation6 + $0xd8] sm:$0xff]
    %v203 = vld [vmem:[#allocation6 + $0xe0] sm:$0xff]
    %v204 = vld [vmem:[#allocation6 + $0xe8] sm:$0xff]
    %v205 = vld [vmem:[#allocation6 + $0xf0] sm:$0xff]
    %v206 = vld [vmem:[#allocation6 + $0xf8] sm:$0xff]
    %v207 = vld [vmem:[#allocation6 + $0x100] sm:$0xff]
    %v208 = vld [vmem:[#allocation6 + $0x108] sm:$0xff]
    %v209 = vld [vmem:[#allocation6 + $0x110] sm:$0xff]
    %v210 = vld [vmem:[#allocation6 + $0x118] sm:$0xff]
    %v211 = vld [vmem:[#allocation6 + $0x120] sm:$0xff]
    %v212 = vld [vmem:[#allocation6 + $0x128] sm:$0xff]
    %v213 = vld [vmem:[#allocation6 + $0x130] sm:$0xff]
    %v214 = vld [vmem:[#allocation6 + $0x138] sm:$0xff]
    %v215 = vld [vmem:[#allocation6 + $0x140] sm:$0xff]
    %v216 = vld [vmem:[#allocation6 + $0x148] sm:$0xff]
    %v217 = vld [vmem:[#allocation6 + $0x150] sm:$0xff]
    %v218 = vld [vmem:[#allocation6 + $0x158] sm:$0xff]
    %v219 = vld [vmem:[#allocation6 + $0x160] sm:$0xff]
    %v220 = vld [vmem:[#allocation6 + $0x168] sm:$0xff]
    %v221 = vld [vmem:[#allocation6 + $0x170] sm:$0xff]
    %v222 = vld [vmem:[#allocation6 + $0x178] sm:$0xff]
    %v223 = vld [vmem:[#allocation6 + $0x180] sm:$0xff]
    %v224 = vld [vmem:[#allocation6 + $0x188] sm:$0xff]
    %v225 = vld [vmem:[#allocation6 + $0x190] sm:$0xff]
    %v226 = vld [vmem:[#allocation6 + $0x198] sm:$0xff]
    %v227 = vld [vmem:[#allocation6 + $0x1a0] sm:$0xff]
    %v228 = vld [vmem:[#allocation6 + $0x1a8] sm:$0xff]
    %v229 = vld [vmem:[#allocation6 + $0x1b0] sm:$0xff]
    %v230 = vld [vmem:[#allocation6 + $0x1b8] sm:$0xff]
    %v231 = vld [vmem:[#allocation6 + $0x1c0] sm:$0xff]
    %v232 = vld [vmem:[#allocation6 + $0x1c8] sm:$0xff]
    %v233 = vld [vmem:[#allocation6 + $0x1d0] sm:$0xff]
    %v234 = vld [vmem:[#allocation6 + $0x1d8] sm:$0xff]
    %v235 = vld [vmem:[#allocation6 + $0x1e0] sm:$0xff]
    %v236 = vld [vmem:[#allocation6 + $0x1e8] sm:$0xff]
    %v237 = vld [vmem:[#allocation6 + $0x1f0] sm:$0xff]
    %v238 = vld [vmem:[#allocation6 + $0x1f8] sm:$0xff]
    %v239 = vld [vmem:[#allocation6 + $0x200] sm:$0xff]
    %v240 = vld [vmem:[#allocation6 + $0x208] sm:$0xff]
    %v241 = vld [vmem:[#allocation6 + $0x210] sm:$0xff]
    %v242 = vld [vmem:[#allocation6 + $0x218] sm:$0xff]
    %v243 = vld [vmem:[#allocation6 + $0x220] sm:$0xff]
    %v244 = vld [vmem:[#allocation6 + $0x228] sm:$0xff]
    %v245 = vld [vmem:[#allocation6 + $0x230] sm:$0xff]
    %v246 = vld [vmem:[#allocation6 + $0x238] sm:$0xff]
    %v247 = vld [vmem:[#allocation6 + $0x240] sm:$0xff]
    %v248 = vld [vmem:[#allocation6 + $0x248] sm:$0xff]
    %v249 = vld [vmem:[#allocation6 + $0x250] sm:$0xff]
    %v250 = vld [vmem:[#allocation6 + $0x258] sm:$0xff]
    %v251 = vld [vmem:[#allocation6 + $0x260] sm:$0xff]
    %v252 = vld [vmem:[#allocation6 + $0x268] sm:$0xff]
    %v253 = vld [vmem:[#allocation6 + $0x270] sm:$0xff]
    %v254 = vld [vmem:[#allocation6 + $0x278] sm:$0xff]
    %v255 = vld [vmem:[#allocation6 + $0x280] sm:$0xff]
    %v256 = vld [vmem:[#allocation6 + $0x288] sm:$0xff]
    %v257 = vld [vmem:[#allocation6 + $0x290] sm:$0xff]
    %v258 = vld [vmem:[#allocation6 + $0x298] sm:$0xff]
    %v259 = vld [vmem:[#allocation6 + $0x2a0] sm:$0xff]
    %v260 = vld [vmem:[#allocation6 + $0x2a8] sm:$0xff]
    %v261 = vld [vmem:[#allocation6 + $0x2b0] sm:$0xff]
    %v262 = vld [vmem:[#allocation6 + $0x2b8] sm:$0xff]
    %v263 = vld [vmem:[#allocation6 + $0x2c0] sm:$0xff]
    %v264 = vld [vmem:[#allocation6 + $0x2c8] sm:$0xff]
    %v265 = vld [vmem:[#allocation6 + $0x2d0] sm:$0xff]
    %v266 = vld [vmem:[#allocation6 + $0x2d8] sm:$0xff]
    %v267 = vld [vmem:[#allocation6 + $0x2e0] sm:$0xff]
    %v268 = vld [vmem:[#allocation6 + $0x2e8] sm:$0xff]
    %v269 = vld [vmem:[#allocation6 + $0x2f0] sm:$0xff]
    %v270 = vld [vmem:[#allocation6 + $0x2f8] sm:$0xff]
    %v271 = vld [vmem:[#allocation6 + $0x300] sm:$0xff]
    %v272 = vld [vmem:[#allocation6 + $0x308] sm:$0xff]
    %v273 = vld [vmem:[#allocation6 + $0x310] sm:$0xff]
    %v274 = vld [vmem:[#allocation6 + $0x318] sm:$0xff]
    %v275 = vld [vmem:[#allocation6 + $0x320] sm:$0xff]
    %v276 = vld [vmem:[#allocation6 + $0x328] sm:$0xff]
    %v277 = vld [vmem:[#allocation6 + $0x330] sm:$0xff]
    %v278 = vld [vmem:[#allocation6 + $0x338] sm:$0xff]
    %v279 = vld [vmem:[#allocation6 + $0x340] sm:$0xff]
    %v280 = vld [vmem:[#allocation6 + $0x348] sm:$0xff]
    %v281 = vld [vmem:[#allocation6 + $0x350] sm:$0xff]
    %v282 = vld [vmem:[#allocation6 + $0x358] sm:$0xff]
    %v283 = vld [vmem:[#allocation6 + $0x360] sm:$0xff]
    %v284 = vld [vmem:[#allocation6 + $0x368] sm:$0xff]
    %v285 = vld [vmem:[#allocation6 + $0x370] sm:$0xff]
    %v286 = vld [vmem:[#allocation6 + $0x378] sm:$0xff]
    %v287 = vld [vmem:[#allocation6 + $0x380] sm:$0xff]
    %v288 = vld [vmem:[#allocation6 + $0x388] sm:$0xff]
    %v289 = vld [vmem:[#allocation6 + $0x390] sm:$0xff]
    %v290 = vld [vmem:[#allocation6 + $0x398] sm:$0xff]
    %v291 = vld [vmem:[#allocation6 + $0x3a0] sm:$0xff]
    %v292 = vld [vmem:[#allocation6 + $0x3a8] sm:$0xff]
    %v293 = vld [vmem:[#allocation6 + $0x3b0] sm:$0xff]
    %v294 = vld [vmem:[#allocation6 + $0x3b8] sm:$0xff]
    %v295 = vld [vmem:[#allocation6 + $0x3c0] sm:$0xff]
    %v296 = vld [vmem:[#allocation6 + $0x3c8] sm:$0xff]
    %v297 = vld [vmem:[#allocation6 + $0x3d0] sm:$0xff]
    %v298 = vld [vmem:[#allocation6 + $0x3d8] sm:$0xff]
    %v299 = vld [vmem:[#allocation6 + $0x3e0] sm:$0xff]
    %v300 = vld [vmem:[#allocation6 + $0x3e8] sm:$0xff]
    %v301 = vld [vmem:[#allocation6 + $0x3f0] sm:$0xff]
    %v302 = vld [vmem:[#allocation6 + $0x3f8] sm:$0xff]
    %v303 = vld [vmem:[#allocation6 + $0x400] sm:$0xff]
    %v304 = vld [vmem:[#allocation6 + $0x408] sm:$0xff]
    %v305 = vld [vmem:[#allocation6 + $0x410] sm:$0xff]
    %v306 = vld [vmem:[#allocation6 + $0x418] sm:$0xff]
    %v307 = vld [vmem:[#allocation6 + $0x420] sm:$0xff]
    %v308 = vld [vmem:[#allocation6 + $0x428] sm:$0xff]
    %v309 = vld [vmem:[#allocation6 + $0x430] sm:$0xff]
    %v310 = vld [vmem:[#allocation6 + $0x438] sm:$0xff]
    %v311 = vld [vmem:[#allocation6 + $0x440] sm:$0xff]
    %v312 = vld [vmem:[#allocation6 + $0x448] sm:$0xff]
    %v313 = vld [vmem:[#allocation6 + $0x450] sm:$0xff]
    %v314 = vld [vmem:[#allocation6 + $0x458] sm:$0xff]
    %v315 = vld [vmem:[#allocation6 + $0x460] sm:$0xff]
    %v316 = vld [vmem:[#allocation6 + $0x468] sm:$0xff]
    %v317 = vld [vmem:[#allocation6 + $0x470] sm:$0xff]
    %v318 = vld [vmem:[#allocation6 + $0x478] sm:$0xff]
    %v319 = vld [vmem:[#allocation6 + $0x480] sm:$0xff]
    %v320 = vld [vmem:[#allocation6 + $0x488] sm:$0xff]
    %v321 = vld [vmem:[#allocation6 + $0x490] sm:$0xff]
    %v322 = vld [vmem:[#allocation6 + $0x498] sm:$0xff]
    %v323 = vld [vmem:[#allocation6 + $0x4a0] sm:$0xff]
    %v324 = vld [vmem:[#allocation6 + $0x4a8] sm:$0xff]
    %v325 = vld [vmem:[#allocation6 + $0x4b0] sm:$0xff]
    %v326 = vld [vmem:[#allocation6 + $0x4b8] sm:$0xff]
    %v327 = vld [vmem:[#allocation6 + $0x4c0] sm:$0xff]
    %v328 = vld [vmem:[#allocation6 + $0x4c8] sm:$0xff]
    %v329 = vld [vmem:[#allocation6 + $0x4d0] sm:$0xff]
    %v330 = vld [vmem:[#allocation6 + $0x4d8] sm:$0xff]
    %v331 = vld [vmem:[#allocation6 + $0x4e0] sm:$0xff]
    %v332 = vld [vmem:[#allocation6 + $0x4e8] sm:$0xff]
    %v333 = vld [vmem:[#allocation6 + $0x4f0] sm:$0xff]
    %v334 = vld [vmem:[#allocation6 + $0x4f8] sm:$0xff]
    %v335 = vld [vmem:[#allocation6 + $0x500] sm:$0xff]
    %v336 = vld [vmem:[#allocation6 + $0x508] sm:$0xff]
    %v337 = vld [vmem:[#allocation6 + $0x510] sm:$0xff]
    %v338 = vld [vmem:[#allocation6 + $0x518] sm:$0xff]
    %v339 = vld [vmem:[#allocation6 + $0x520] sm:$0xff]
    %v340 = vld [vmem:[#allocation6 + $0x528] sm:$0xff]
    %v341 = vld [vmem:[#allocation6 + $0x530] sm:$0xff]
    %v342 = vld [vmem:[#allocation6 + $0x538] sm:$0xff]
    %v343 = vld [vmem:[#allocation6 + $0x540] sm:$0xff]
    %v344 = vld [vmem:[#allocation6 + $0x548] sm:$0xff]
    %v345 = vld [vmem:[#allocation6 + $0x550] sm:$0xff]
    %v346 = vld [vmem:[#allocation6 + $0x558] sm:$0xff]
    %v347 = vld [vmem:[#allocation6 + $0x560] sm:$0xff]
    %v348 = vld [vmem:[#allocation6 + $0x568] sm:$0xff]
    %v349 = vld [vmem:[#allocation6 + $0x570] sm:$0xff]
    %v350 = vld [vmem:[#allocation6 + $0x578] sm:$0xff]
    %v351 = vld [vmem:[#allocation6 + $0x580] sm:$0xff]
    %v352 = vld [vmem:[#allocation6 + $0x588] sm:$0xff]
    %v353 = vld [vmem:[#allocation6 + $0x590] sm:$0xff]
    %v354 = vld [vmem:[#allocation6 + $0x598] sm:$0xff]
    %v355 = vld [vmem:[#allocation6 + $0x5a0] sm:$0xff]
    %v356 = vld [vmem:[#allocation6 + $0x5a8] sm:$0xff]
    %v357 = vld [vmem:[#allocation6 + $0x5b0] sm:$0xff]
    %v358 = vld [vmem:[#allocation6 + $0x5b8] sm:$0xff]
    %v359 = vld [vmem:[#allocation6 + $0x5c0] sm:$0xff]
    %v360 = vld [vmem:[#allocation6 + $0x5c8] sm:$0xff]
    %v361 = vld [vmem:[#allocation6 + $0x5d0] sm:$0xff]
    %v362 = vld [vmem:[#allocation6 + $0x5d8] sm:$0xff]
    %v363 = vld [vmem:[#allocation6 + $0x5e0] sm:$0xff]
    %v364 = vld [vmem:[#allocation6 + $0x5e8] sm:$0xff]
    %v365 = vld [vmem:[#allocation6 + $0x5f0] sm:$0xff]
    %v366 = vld [vmem:[#allocation6 + $0x5f8] sm:$0xff]
    %v367 = vld [vmem:[#allocation6 + $0x600] sm:$0xff]
    %v368 = vld [vmem:[#allocation6 + $0x608] sm:$0xff]
    %v369 = vld [vmem:[#allocation6 + $0x610] sm:$0xff]
    %v370 = vld [vmem:[#allocation6 + $0x618] sm:$0xff]
    %v371 = vld [vmem:[#allocation6 + $0x620] sm:$0xff]
    %v372 = vld [vmem:[#allocation6 + $0x628] sm:$0xff]
    %v373 = vld [vmem:[#allocation6 + $0x630] sm:$0xff]
    %v374 = vld [vmem:[#allocation6 + $0x638] sm:$0xff]
    %v375 = vld [vmem:[#allocation6 + $0x640] sm:$0xff]
    %v376 = vld [vmem:[#allocation6 + $0x648] sm:$0xff]
    %v377 = vld [vmem:[#allocation6 + $0x650] sm:$0xff]
    %v378 = vld [vmem:[#allocation6 + $0x658] sm:$0xff]
    %v379 = vld [vmem:[#allocation6 + $0x660] sm:$0xff]
    %v380 = vld [vmem:[#allocation6 + $0x668] sm:$0xff]
    %v381 = vld [vmem:[#allocation6 + $0x670] sm:$0xff]
    %v382 = vld [vmem:[#allocation6 + $0x678] sm:$0xff]
    %v383 = vld [vmem:[#allocation6 + $0x680] sm:$0xff]
    %v384 = vld [vmem:[#allocation6 + $0x688] sm:$0xff]
    %v385 = vld [vmem:[#allocation6 + $0x690] sm:$0xff]
    %v386 = vld [vmem:[#allocation6 + $0x698] sm:$0xff]
    %v387 = vld [vmem:[#allocation6 + $0x6a0] sm:$0xff]
    %v388 = vld [vmem:[#allocation6 + $0x6a8] sm:$0xff]
    %v389 = vld [vmem:[#allocation6 + $0x6b0] sm:$0xff]
    %v390 = vld [vmem:[#allocation6 + $0x6b8] sm:$0xff]
    %v391 = vld [vmem:[#allocation6 + $0x6c0] sm:$0xff]
    %v392 = vld [vmem:[#allocation6 + $0x6c8] sm:$0xff]
    %v393 = vld [vmem:[#allocation6 + $0x6d0] sm:$0xff]
    %v394 = vld [vmem:[#allocation6 + $0x6d8] sm:$0xff]
    %v395 = vld [vmem:[#allocation6 + $0x6e0] sm:$0xff]
    %v396 = vld [vmem:[#allocation6 + $0x6e8] sm:$0xff]
    %v397 = vld [vmem:[#allocation6 + $0x6f0] sm:$0xff]
    %v398 = vld [vmem:[#allocation6 + $0x6f8] sm:$0xff]
    %v399 = vld [vmem:[#allocation6 + $0x700] sm:$0xff]
    %v400 = vld [vmem:[#allocation6 + $0x708] sm:$0xff]
    %v401 = vld [vmem:[#allocation6 + $0x710] sm:$0xff]
    %v402 = vld [vmem:[#allocation6 + $0x718] sm:$0xff]
    %v403 = vld [vmem:[#allocation6 + $0x720] sm:$0xff]
    %v404 = vld [vmem:[#allocation6 + $0x728] sm:$0xff]
    %v405 = vld [vmem:[#allocation6 + $0x730] sm:$0xff]
    %v406 = vld [vmem:[#allocation6 + $0x738] sm:$0xff]
    %v407 = vld [vmem:[#allocation6 + $0x740] sm:$0xff]
    %v408 = vld [vmem:[#allocation6 + $0x748] sm:$0xff]
    %v409 = vld [vmem:[#allocation6 + $0x750] sm:$0xff]
    %v410 = vld [vmem:[#allocation6 + $0x758] sm:$0xff]
    %v411 = vld [vmem:[#allocation6 + $0x760] sm:$0xff]
    %v412 = vld [vmem:[#allocation6 + $0x768] sm:$0xff]
    %v413 = vld [vmem:[#allocation6 + $0x770] sm:$0xff]
    %v414 = vld [vmem:[#allocation6 + $0x778] sm:$0xff]
    %v415 = vld [vmem:[#allocation6 + $0x780] sm:$0xff]
    %v416 = vld [vmem:[#allocation6 + $0x788] sm:$0xff]
    %v417 = vld [vmem:[#allocation6 + $0x790] sm:$0xff]
    %v418 = vld [vmem:[#allocation6 + $0x798] sm:$0xff]
    %v419 = vld [vmem:[#allocation6 + $0x7a0] sm:$0xff]
    %v420 = vld [vmem:[#allocation6 + $0x7a8] sm:$0xff]
    %v421 = vld [vmem:[#allocation6 + $0x7b0] sm:$0xff]
    %v422 = vld [vmem:[#allocation6 + $0x7b8] sm:$0xff]
    %v423 = vld [vmem:[#allocation6 + $0x7c0] sm:$0xff]
    %v424 = vld [vmem:[#allocation6 + $0x7c8] sm:$0xff]
    %v425 = vld [vmem:[#allocation6 + $0x7d0] sm:$0xff]
    %v426 = vld [vmem:[#allocation6 + $0x7d8] sm:$0xff]
    %v427 = vld [vmem:[#allocation6 + $0x7e0] sm:$0xff]
    %v428 = vld [vmem:[#allocation6 + $0x7e8] sm:$0xff]
    %v429 = vld [vmem:[#allocation6 + $0x7f0] sm:$0xff]
    %v430 = vld [vmem:[#allocation6 + $0x7f8] sm:$0xff]
    %v431 = vld [vmem:[#allocation6 + $0x800] sm:$0xff]
    %v432 = vld [vmem:[#allocation6 + $0x808] sm:$0xff]
    %v433 = vld [vmem:[#allocation6 + $0x810] sm:$0xff]
    %v434 = vld [vmem:[#allocation6 + $0x818] sm:$0xff]
    %v435 = vld [vmem:[#allocation6 + $0x820] sm:$0xff]
    %v436 = vld [vmem:[#allocation6 + $0x828] sm:$0xff]
    %v437 = vld [vmem:[#allocation6 + $0x830] sm:$0xff]
    %v438 = vld [vmem:[#allocation6 + $0x838] sm:$0xff]
    %v439 = vld [vmem:[#allocation6 + $0x840] sm:$0xff]
    %v440 = vld [vmem:[#allocation6 + $0x848] sm:$0xff]
    %v441 = vld [vmem:[#allocation6 + $0x850] sm:$0xff]
    %v442 = vld [vmem:[#allocation6 + $0x858] sm:$0xff]
    %v443 = vld [vmem:[#allocation6 + $0x860] sm:$0xff]
    %v444 = vld [vmem:[#allocation6 + $0x868] sm:$0xff]
    %v445 = vld [vmem:[#allocation6 + $0x870] sm:$0xff]
    %v446 = vld [vmem:[#allocation6 + $0x878] sm:$0xff]
    %v447 = vld [vmem:[#allocation6 + $0x880] sm:$0xff]
    %v448 = vld [vmem:[#allocation6 + $0x888] sm:$0xff]
    %v449 = vld [vmem:[#allocation6 + $0x890] sm:$0xff]
    %v450 = vld [vmem:[#allocation6 + $0x898] sm:$0xff]
    %v451 = vld [vmem:[#allocation6 + $0x8a0] sm:$0xff]
    %v452 = vld [vmem:[#allocation6 + $0x8a8] sm:$0xff]
    %v453 = vld [vmem:[#allocation6 + $0x8b0] sm:$0xff]
    %v454 = vld [vmem:[#allocation6 + $0x8b8] sm:$0xff]
    %v455 = vld [vmem:[#allocation6 + $0x8c0] sm:$0xff]
    %v456 = vld [vmem:[#allocation6 + $0x8c8] sm:$0xff]
    %v457 = vld [vmem:[#allocation6 + $0x8d0] sm:$0xff]
    %v458 = vld [vmem:[#allocation6 + $0x8d8] sm:$0xff]
    %v459 = vld [vmem:[#allocation6 + $0x8e0] sm:$0xff]
    %v460 = vld [vmem:[#allocation6 + $0x8e8] sm:$0xff]
    %v461 = vld [vmem:[#allocation6 + $0x8f0] sm:$0xff]
    %v462 = vld [vmem:[#allocation6 + $0x8f8] sm:$0xff]
    %v463 = vld [vmem:[#allocation8] sm:$0x3]
    %v465 = vperm.slane %v463, 0
    %v466 = vperm.slane %v463, 1
    %v757 = vunpack.c.l.b16 %v175
    %v758 = vunpack.c.h.b16 %v175
    %v759 = vunpack.c.l.b16 %v176
    %v760 = vunpack.c.h.b16 %v176
    %v761 = vunpack.c.l.b16 %v177
    %v762 = vunpack.c.h.b16 %v177
    %v763 = vunpack.c.l.b16 %v178
    %v764 = vunpack.c.h.b16 %v178
    %v765 = vunpack.c.l.b16 %v179
    %v766 = vunpack.c.h.b16 %v179
    %v767 = vunpack.c.l.b16 %v180
    %v768 = vunpack.c.h.b16 %v180
    %v769 = vunpack.c.l.b16 %v181
    %v770 = vunpack.c.h.b16 %v181
    %v771 = vunpack.c.l.b16 %v182
    %v772 = vunpack.c.h.b16 %v182
    %v773 = vunpack.c.l.b16 %v183
    %v774 = vunpack.c.h.b16 %v183
    %v775 = vunpack.c.l.b16 %v184
    %v776 = vunpack.c.h.b16 %v184
    %v777 = vunpack.c.l.b16 %v185
    %v778 = vunpack.c.h.b16 %v185
    %v779 = vunpack.c.l.b16 %v186
    %v780 = vunpack.c.h.b16 %v186
    %v781 = vunpack.c.l.b16 %v187
    %v782 = vunpack.c.h.b16 %v187
    %v783 = vunpack.c.l.b16 %v188
    %v784 = vunpack.c.h.b16 %v188
    %v785 = vunpack.c.l.b16 %v189
    %v786 = vunpack.c.h.b16 %v189
    %v787 = vunpack.c.l.b16 %v190
    %v788 = vunpack.c.h.b16 %v190
    %v789 = vunpack.c.l.b16 %v191
    %v790 = vunpack.c.h.b16 %v191
    %v791 = vunpack.c.l.b16 %v192
    %v792 = vunpack.c.h.b16 %v192
    %v793 = vunpack.c.l.b16 %v193
    %v794 = vunpack.c.h.b16 %v193
    %v795 = vunpack.c.l.b16 %v194
    %v796 = vunpack.c.h.b16 %v194
    %v797 = vunpack.c.l.b16 %v195
    %v798 = vunpack.c.h.b16 %v195
    %v799 = vunpack.c.l.b16 %v196
    %v800 = vunpack.c.h.b16 %v196
    %v801 = vunpack.c.l.b16 %v197
    %v802 = vunpack.c.h.b16 %v197
    %v803 = vunpack.c.l.b16 %v198
    %v804 = vunpack.c.h.b16 %v198
    %v805 = vunpack.c.l.b16 %v199
    %v806 = vunpack.c.h.b16 %v199
    %v807 = vunpack.c.l.b16 %v200
    %v808 = vunpack.c.h.b16 %v200
    %v809 = vunpack.c.l.b16 %v201
    %v810 = vunpack.c.h.b16 %v201
    %v811 = vunpack.c.l.b16 %v202
    %v812 = vunpack.c.h.b16 %v202
    %v813 = vunpack.c.l.b16 %v203
    %v814 = vunpack.c.h.b16 %v203
    %v815 = vunpack.c.l.b16 %v204
    %v816 = vunpack.c.h.b16 %v204
    %v817 = vunpack.c.l.b16 %v205
    %v818 = vunpack.c.h.b16 %v205
    %v819 = vunpack.c.l.b16 %v206
    %v820 = vunpack.c.h.b16 %v206
    %v821 = vunpack.c.l.b16 %v207
    %v822 = vunpack.c.h.b16 %v207
    %v823 = vunpack.c.l.b16 %v208
    %v824 = vunpack.c.h.b16 %v208
    %v825 = vunpack.c.l.b16 %v209
    %v826 = vunpack.c.h.b16 %v209
    %v827 = vunpack.c.l.b16 %v210
    %v828 = vunpack.c.h.b16 %v210
    %v829 = vunpack.c.l.b16 %v211
    %v830 = vunpack.c.h.b16 %v211
    %v831 = vunpack.c.l.b16 %v212
    %v832 = vunpack.c.h.b16 %v212
    %v833 = vunpack.c.l.b16 %v213
    %v834 = vunpack.c.h.b16 %v213
    %v835 = vunpack.c.l.b16 %v214
    %v836 = vunpack.c.h.b16 %v214
    %v837 = vunpack.c.l.b16 %v215
    %v838 = vunpack.c.h.b16 %v215
    %v839 = vunpack.c.l.b16 %v216
    %v840 = vunpack.c.h.b16 %v216
    %v841 = vunpack.c.l.b16 %v217
    %v842 = vunpack.c.h.b16 %v217
    %v843 = vunpack.c.l.b16 %v218
    %v844 = vunpack.c.h.b16 %v218
    %v845 = vunpack.c.l.b16 %v219
    %v846 = vunpack.c.h.b16 %v219
    %v847 = vunpack.c.l.b16 %v220
    %v848 = vunpack.c.h.b16 %v220
    %v849 = vunpack.c.l.b16 %v221
    %v850 = vunpack.c.h.b16 %v221
    %v851 = vunpack.c.l.b16 %v222
    %v852 = vunpack.c.h.b16 %v222
    %v853 = vunpack.c.l.b16 %v223
    %v854 = vunpack.c.h.b16 %v223
    %v855 = vunpack.c.l.b16 %v224
    %v856 = vunpack.c.h.b16 %v224
    %v857 = vunpack.c.l.b16 %v225
    %v858 = vunpack.c.h.b16 %v225
    %v859 = vunpack.c.l.b16 %v226
    %v860 = vunpack.c.h.b16 %v226
    %v861 = vunpack.c.l.b16 %v227
    %v862 = vunpack.c.h.b16 %v227
    %v863 = vunpack.c.l.b16 %v228
    %v864 = vunpack.c.h.b16 %v228
    %v865 = vunpack.c.l.b16 %v229
    %v866 = vunpack.c.h.b16 %v229
    %v867 = vunpack.c.l.b16 %v230
    %v868 = vunpack.c.h.b16 %v230
    %v869 = vunpack.c.l.b16 %v231
    %v870 = vunpack.c.h.b16 %v231
    %v871 = vunpack.c.l.b16 %v232
    %v872 = vunpack.c.h.b16 %v232
    %v873 = vunpack.c.l.b16 %v233
    %v874 = vunpack.c.h.b16 %v233
    %v875 = vunpack.c.l.b16 %v234
    %v876 = vunpack.c.h.b16 %v234
    %v877 = vunpack.c.l.b16 %v235
    %v878 = vunpack.c.h.b16 %v235
    %v879 = vunpack.c.l.b16 %v236
    %v880 = vunpack.c.h.b16 %v236
    %v881 = vunpack.c.l.b16 %v237
    %v882 = vunpack.c.h.b16 %v237
    %v883 = vunpack.c.l.b16 %v238
    %v884 = vunpack.c.h.b16 %v238
    %v885 = vunpack.c.l.b16 %v239
    %v886 = vunpack.c.h.b16 %v239
    %v887 = vunpack.c.l.b16 %v240
    %v888 = vunpack.c.h.b16 %v240
    %v889 = vunpack.c.l.b16 %v241
    %v890 = vunpack.c.h.b16 %v241
    %v891 = vunpack.c.l.b16 %v242
    %v892 = vunpack.c.h.b16 %v242
    %v893 = vunpack.c.l.b16 %v243
    %v894 = vunpack.c.h.b16 %v243
    %v895 = vunpack.c.l.b16 %v244
    %v896 = vunpack.c.h.b16 %v244
    %v897 = vunpack.c.l.b16 %v245
    %v898 = vunpack.c.h.b16 %v245
    %v899 = vunpack.c.l.b16 %v246
    %v900 = vunpack.c.h.b16 %v246
    %v901 = vunpack.c.l.b16 %v247
    %v902 = vunpack.c.h.b16 %v247
    %v903 = vunpack.c.l.b16 %v248
    %v904 = vunpack.c.h.b16 %v248
    %v905 = vunpack.c.l.b16 %v249
    %v906 = vunpack.c.h.b16 %v249
    %v907 = vunpack.c.l.b16 %v250
    %v908 = vunpack.c.h.b16 %v250
    %v909 = vunpack.c.l.b16 %v251
    %v910 = vunpack.c.h.b16 %v251
    %v911 = vunpack.c.l.b16 %v252
    %v912 = vunpack.c.h.b16 %v252
    %v913 = vunpack.c.l.b16 %v253
    %v914 = vunpack.c.h.b16 %v253
    %v915 = vunpack.c.l.b16 %v254
    %v916 = vunpack.c.h.b16 %v254
    %v917 = vunpack.c.l.b16 %v255
    %v918 = vunpack.c.h.b16 %v255
    %v919 = vunpack.c.l.b16 %v256
    %v920 = vunpack.c.h.b16 %v256
    %v921 = vunpack.c.l.b16 %v257
    %v922 = vunpack.c.h.b16 %v257
    %v923 = vunpack.c.l.b16 %v258
    %v924 = vunpack.c.h.b16 %v258
    %v925 = vunpack.c.l.b16 %v259
    %v926 = vunpack.c.h.b16 %v259
    %v927 = vunpack.c.l.b16 %v260
    %v928 = vunpack.c.h.b16 %v260
    %v929 = vunpack.c.l.b16 %v261
    %v930 = vunpack.c.h.b16 %v261
    %v931 = vunpack.c.l.b16 %v262
    %v932 = vunpack.c.h.b16 %v262
    %v933 = vunpack.c.l.b16 %v263
    %v934 = vunpack.c.h.b16 %v263
    %v935 = vunpack.c.l.b16 %v264
    %v936 = vunpack.c.h.b16 %v264
    %v937 = vunpack.c.l.b16 %v265
    %v938 = vunpack.c.h.b16 %v265
    %v939 = vunpack.c.l.b16 %v266
    %v940 = vunpack.c.h.b16 %v266
    %v941 = vunpack.c.l.b16 %v267
    %v942 = vunpack.c.h.b16 %v267
    %v943 = vunpack.c.l.b16 %v268
    %v944 = vunpack.c.h.b16 %v268
    %v945 = vunpack.c.l.b16 %v269
    %v946 = vunpack.c.h.b16 %v269
    %v947 = vunpack.c.l.b16 %v270
    %v948 = vunpack.c.h.b16 %v270
    %v949 = vunpack.c.l.b16 %v271
    %v950 = vunpack.c.h.b16 %v271
    %v951 = vunpack.c.l.b16 %v272
    %v952 = vunpack.c.h.b16 %v272
    %v953 = vunpack.c.l.b16 %v273
    %v954 = vunpack.c.h.b16 %v273
    %v955 = vunpack.c.l.b16 %v274
    %v956 = vunpack.c.h.b16 %v274
    %v957 = vunpack.c.l.b16 %v275
    %v958 = vunpack.c.h.b16 %v275
    %v959 = vunpack.c.l.b16 %v276
    %v960 = vunpack.c.h.b16 %v276
    %v961 = vunpack.c.l.b16 %v277
    %v962 = vunpack.c.h.b16 %v277
    %v963 = vunpack.c.l.b16 %v278
    %v964 = vunpack.c.h.b16 %v278
    %v965 = vunpack.c.l.b16 %v279
    %v966 = vunpack.c.h.b16 %v279
    %v967 = vunpack.c.l.b16 %v280
    %v968 = vunpack.c.h.b16 %v280
    %v969 = vunpack.c.l.b16 %v281
    %v970 = vunpack.c.h.b16 %v281
    %v971 = vunpack.c.l.b16 %v282
    %v972 = vunpack.c.h.b16 %v282
    %v973 = vunpack.c.l.b16 %v283
    %v974 = vunpack.c.h.b16 %v283
    %v975 = vunpack.c.l.b16 %v284
    %v976 = vunpack.c.h.b16 %v284
    %v977 = vunpack.c.l.b16 %v285
    %v978 = vunpack.c.h.b16 %v285
    %v979 = vunpack.c.l.b16 %v286
    %v980 = vunpack.c.h.b16 %v286
    %v981 = vunpack.c.l.b16 %v287
    %v982 = vunpack.c.h.b16 %v287
    %v983 = vunpack.c.l.b16 %v288
    %v984 = vunpack.c.h.b16 %v288
    %v985 = vunpack.c.l.b16 %v289
    %v986 = vunpack.c.h.b16 %v289
    %v987 = vunpack.c.l.b16 %v290
    %v988 = vunpack.c.h.b16 %v290
    %v989 = vunpack.c.l.b16 %v291
    %v990 = vunpack.c.h.b16 %v291
    %v991 = vunpack.c.l.b16 %v292
    %v992 = vunpack.c.h.b16 %v292
    %v993 = vunpack.c.l.b16 %v293
    %v994 = vunpack.c.h.b16 %v293
    %v995 = vunpack.c.l.b16 %v294
    %v996 = vunpack.c.h.b16 %v294
    %v997 = vunpack.c.l.b16 %v295
    %v998 = vunpack.c.h.b16 %v295
    %v999 = vunpack.c.l.b16 %v296
    %v1000 = vunpack.c.h.b16 %v296
    %v1001 = vunpack.c.l.b16 %v297
    %v1002 = vunpack.c.h.b16 %v297
    %v1003 = vunpack.c.l.b16 %v298
    %v1004 = vunpack.c.h.b16 %v298
    %v1005 = vunpack.c.l.b16 %v299
    %v1006 = vunpack.c.h.b16 %v299
    %v1007 = vunpack.c.l.b16 %v300
    %v1008 = vunpack.c.h.b16 %v300
    %v1009 = vunpack.c.l.b16 %v301
    %v1010 = vunpack.c.h.b16 %v301
    %v1011 = vunpack.c.l.b16 %v302
    %v1012 = vunpack.c.h.b16 %v302
    %v1013 = vunpack.c.l.b16 %v303
    %v1014 = vunpack.c.h.b16 %v303
    %v1015 = vunpack.c.l.b16 %v304
    %v1016 = vunpack.c.h.b16 %v304
    %v1017 = vunpack.c.l.b16 %v305
    %v1018 = vunpack.c.h.b16 %v305
    %v1019 = vunpack.c.l.b16 %v306
    %v1020 = vunpack.c.h.b16 %v306
    %v1021 = vunpack.c.l.b16 %v307
    %v1022 = vunpack.c.h.b16 %v307
    %v1023 = vunpack.c.l.b16 %v308
    %v1024 = vunpack.c.h.b16 %v308
    %v1025 = vunpack.c.l.b16 %v309
    %v1026 = vunpack.c.h.b16 %v309
    %v1027 = vunpack.c.l.b16 %v310
    %v1028 = vunpack.c.h.b16 %v310
    %v1029 = vunpack.c.l.b16 %v311
    %v1030 = vunpack.c.h.b16 %v311
    %v1031 = vunpack.c.l.b16 %v312
    %v1032 = vunpack.c.h.b16 %v312
    %v1033 = vunpack.c.l.b16 %v313
    %v1034 = vunpack.c.h.b16 %v313
    %v1035 = vunpack.c.l.b16 %v314
    %v1036 = vunpack.c.h.b16 %v314
    %v1037 = vunpack.c.l.b16 %v315
    %v1038 = vunpack.c.h.b16 %v315
    %v1039 = vunpack.c.l.b16 %v316
    %v1040 = vunpack.c.h.b16 %v316
    %v1041 = vunpack.c.l.b16 %v317
    %v1042 = vunpack.c.h.b16 %v317
    %v1043 = vunpack.c.l.b16 %v318
    %v1044 = vunpack.c.h.b16 %v318
    %v1045 = vunpack.c.l.b16 %v319
    %v1046 = vunpack.c.h.b16 %v319
    %v1047 = vunpack.c.l.b16 %v320
    %v1048 = vunpack.c.h.b16 %v320
    %v1049 = vunpack.c.l.b16 %v321
    %v1050 = vunpack.c.h.b16 %v321
    %v1051 = vunpack.c.l.b16 %v322
    %v1052 = vunpack.c.h.b16 %v322
    %v1053 = vunpack.c.l.b16 %v323
    %v1054 = vunpack.c.h.b16 %v323
    %v1055 = vunpack.c.l.b16 %v324
    %v1056 = vunpack.c.h.b16 %v324
    %v1057 = vunpack.c.l.b16 %v325
    %v1058 = vunpack.c.h.b16 %v325
    %v1059 = vunpack.c.l.b16 %v326
    %v1060 = vunpack.c.h.b16 %v326
    %v1061 = vunpack.c.l.b16 %v327
    %v1062 = vunpack.c.h.b16 %v327
    %v1063 = vunpack.c.l.b16 %v328
    %v1064 = vunpack.c.h.b16 %v328
    %v1065 = vunpack.c.l.b16 %v329
    %v1066 = vunpack.c.h.b16 %v329
    %v1067 = vunpack.c.l.b16 %v330
    %v1068 = vunpack.c.h.b16 %v330
    %v1069 = vunpack.c.l.b16 %v331
    %v1070 = vunpack.c.h.b16 %v331
    %v1071 = vunpack.c.l.b16 %v332
    %v1072 = vunpack.c.h.b16 %v332
    %v1073 = vunpack.c.l.b16 %v333
    %v1074 = vunpack.c.h.b16 %v333
    %v1075 = vunpack.c.l.b16 %v334
    %v1076 = vunpack.c.h.b16 %v334
    %v1077 = vunpack.c.l.b16 %v335
    %v1078 = vunpack.c.h.b16 %v335
    %v1079 = vunpack.c.l.b16 %v336
    %v1080 = vunpack.c.h.b16 %v336
    %v1081 = vunpack.c.l.b16 %v337
    %v1082 = vunpack.c.h.b16 %v337
    %v1083 = vunpack.c.l.b16 %v338
    %v1084 = vunpack.c.h.b16 %v338
    %v1085 = vunpack.c.l.b16 %v339
    %v1086 = vunpack.c.h.b16 %v339
    %v1087 = vunpack.c.l.b16 %v340
    %v1088 = vunpack.c.h.b16 %v340
    %v1089 = vunpack.c.l.b16 %v341
    %v1090 = vunpack.c.h.b16 %v341
    %v1091 = vunpack.c.l.b16 %v342
    %v1092 = vunpack.c.h.b16 %v342
    %v1093 = vunpack.c.l.b16 %v343
    %v1094 = vunpack.c.h.b16 %v343
    %v1095 = vunpack.c.l.b16 %v344
    %v1096 = vunpack.c.h.b16 %v344
    %v1097 = vunpack.c.l.b16 %v345
    %v1098 = vunpack.c.h.b16 %v345
    %v1099 = vunpack.c.l.b16 %v346
    %v1100 = vunpack.c.h.b16 %v346
    %v1101 = vunpack.c.l.b16 %v347
    %v1102 = vunpack.c.h.b16 %v347
    %v1103 = vunpack.c.l.b16 %v348
    %v1104 = vunpack.c.h.b16 %v348
    %v1105 = vunpack.c.l.b16 %v349
    %v1106 = vunpack.c.h.b16 %v349
    %v1107 = vunpack.c.l.b16 %v350
    %v1108 = vunpack.c.h.b16 %v350
    %v1109 = vunpack.c.l.b16 %v351
    %v1110 = vunpack.c.h.b16 %v351
    %v1111 = vunpack.c.l.b16 %v352
    %v1112 = vunpack.c.h.b16 %v352
    %v1113 = vunpack.c.l.b16 %v353
    %v1114 = vunpack.c.h.b16 %v353
    %v1115 = vunpack.c.l.b16 %v354
    %v1116 = vunpack.c.h.b16 %v354
    %v1117 = vunpack.c.l.b16 %v355
    %v1118 = vunpack.c.h.b16 %v355
    %v1119 = vunpack.c.l.b16 %v356
    %v1120 = vunpack.c.h.b16 %v356
    %v1121 = vunpack.c.l.b16 %v357
    %v1122 = vunpack.c.h.b16 %v357
    %v1123 = vunpack.c.l.b16 %v358
    %v1124 = vunpack.c.h.b16 %v358
    %v1125 = vunpack.c.l.b16 %v359
    %v1126 = vunpack.c.h.b16 %v359
    %v1127 = vunpack.c.l.b16 %v360
    %v1128 = vunpack.c.h.b16 %v360
    %v1129 = vunpack.c.l.b16 %v361
    %v1130 = vunpack.c.h.b16 %v361
    %v1131 = vunpack.c.l.b16 %v362
    %v1132 = vunpack.c.h.b16 %v362
    %v1133 = vunpack.c.l.b16 %v363
    %v1134 = vunpack.c.h.b16 %v363
    %v1135 = vunpack.c.l.b16 %v364
    %v1136 = vunpack.c.h.b16 %v364
    %v1137 = vunpack.c.l.b16 %v365
    %v1138 = vunpack.c.h.b16 %v365
    %v1139 = vunpack.c.l.b16 %v366
    %v1140 = vunpack.c.h.b16 %v366
    %v1141 = vunpack.c.l.b16 %v367
    %v1142 = vunpack.c.h.b16 %v367
    %v1143 = vunpack.c.l.b16 %v368
    %v1144 = vunpack.c.h.b16 %v368
    %v1145 = vunpack.c.l.b16 %v369
    %v1146 = vunpack.c.h.b16 %v369
    %v1147 = vunpack.c.l.b16 %v370
    %v1148 = vunpack.c.h.b16 %v370
    %v1149 = vunpack.c.l.b16 %v371
    %v1150 = vunpack.c.h.b16 %v371
    %v1151 = vunpack.c.l.b16 %v372
    %v1152 = vunpack.c.h.b16 %v372
    %v1153 = vunpack.c.l.b16 %v373
    %v1154 = vunpack.c.h.b16 %v373
    %v1155 = vunpack.c.l.b16 %v374
    %v1156 = vunpack.c.h.b16 %v374
    %v1157 = vunpack.c.l.b16 %v375
    %v1158 = vunpack.c.h.b16 %v375
    %v1159 = vunpack.c.l.b16 %v376
    %v1160 = vunpack.c.h.b16 %v376
    %v1161 = vunpack.c.l.b16 %v377
    %v1162 = vunpack.c.h.b16 %v377
    %v1163 = vunpack.c.l.b16 %v378
    %v1164 = vunpack.c.h.b16 %v378
    %v1165 = vunpack.c.l.b16 %v379
    %v1166 = vunpack.c.h.b16 %v379
    %v1167 = vunpack.c.l.b16 %v380
    %v1168 = vunpack.c.h.b16 %v380
    %v1169 = vunpack.c.l.b16 %v381
    %v1170 = vunpack.c.h.b16 %v381
    %v1171 = vunpack.c.l.b16 %v382
    %v1172 = vunpack.c.h.b16 %v382
    %v1173 = vunpack.c.l.b16 %v383
    %v1174 = vunpack.c.h.b16 %v383
    %v1175 = vunpack.c.l.b16 %v384
    %v1176 = vunpack.c.h.b16 %v384
    %v1177 = vunpack.c.l.b16 %v385
    %v1178 = vunpack.c.h.b16 %v385
    %v1179 = vunpack.c.l.b16 %v386
    %v1180 = vunpack.c.h.b16 %v386
    %v1181 = vunpack.c.l.b16 %v387
    %v1182 = vunpack.c.h.b16 %v387
    %v1183 = vunpack.c.l.b16 %v388
    %v1184 = vunpack.c.h.b16 %v388
    %v1185 = vunpack.c.l.b16 %v389
    %v1186 = vunpack.c.h.b16 %v389
    %v1187 = vunpack.c.l.b16 %v390
    %v1188 = vunpack.c.h.b16 %v390
    %v1189 = vunpack.c.l.b16 %v391
    %v1190 = vunpack.c.h.b16 %v391
    %v1191 = vunpack.c.l.b16 %v392
    %v1192 = vunpack.c.h.b16 %v392
    %v1193 = vunpack.c.l.b16 %v393
    %v1194 = vunpack.c.h.b16 %v393
    %v1195 = vunpack.c.l.b16 %v394
    %v1196 = vunpack.c.h.b16 %v394
    %v1197 = vunpack.c.l.b16 %v395
    %v1198 = vunpack.c.h.b16 %v395
    %v1199 = vunpack.c.l.b16 %v396
    %v1200 = vunpack.c.h.b16 %v396
    %v1201 = vunpack.c.l.b16 %v397
    %v1202 = vunpack.c.h.b16 %v397
    %v1203 = vunpack.c.l.b16 %v398
    %v1204 = vunpack.c.h.b16 %v398
    %v1205 = vunpack.c.l.b16 %v399
    %v1206 = vunpack.c.h.b16 %v399
    %v1207 = vunpack.c.l.b16 %v400
    %v1208 = vunpack.c.h.b16 %v400
    %v1209 = vunpack.c.l.b16 %v401
    %v1210 = vunpack.c.h.b16 %v401
    %v1211 = vunpack.c.l.b16 %v402
    %v1212 = vunpack.c.h.b16 %v402
    %v1213 = vunpack.c.l.b16 %v403
    %v1214 = vunpack.c.h.b16 %v403
    %v1215 = vunpack.c.l.b16 %v404
    %v1216 = vunpack.c.h.b16 %v404
    %v1217 = vunpack.c.l.b16 %v405
    %v1218 = vunpack.c.h.b16 %v405
    %v1219 = vunpack.c.l.b16 %v406
    %v1220 = vunpack.c.h.b16 %v406
    %v1221 = vunpack.c.l.b16 %v407
    %v1222 = vunpack.c.h.b16 %v407
    %v1223 = vunpack.c.l.b16 %v408
    %v1224 = vunpack.c.h.b16 %v408
    %v1225 = vunpack.c.l.b16 %v409
    %v1226 = vunpack.c.h.b16 %v409
    %v1227 = vunpack.c.l.b16 %v410
    %v1228 = vunpack.c.h.b16 %v410
    %v1229 = vunpack.c.l.b16 %v411
    %v1230 = vunpack.c.h.b16 %v411
    %v1231 = vunpack.c.l.b16 %v412
    %v1232 = vunpack.c.h.b16 %v412
    %v1233 = vunpack.c.l.b16 %v413
    %v1234 = vunpack.c.h.b16 %v413
    %v1235 = vunpack.c.l.b16 %v414
    %v1236 = vunpack.c.h.b16 %v414
    %v1237 = vunpack.c.l.b16 %v415
    %v1238 = vunpack.c.h.b16 %v415
    %v1239 = vunpack.c.l.b16 %v416
    %v1240 = vunpack.c.h.b16 %v416
    %v1241 = vunpack.c.l.b16 %v417
    %v1242 = vunpack.c.h.b16 %v417
    %v1243 = vunpack.c.l.b16 %v418
    %v1244 = vunpack.c.h.b16 %v418
    %v1245 = vunpack.c.l.b16 %v419
    %v1246 = vunpack.c.h.b16 %v419
    %v1247 = vunpack.c.l.b16 %v420
    %v1248 = vunpack.c.h.b16 %v420
    %v1249 = vunpack.c.l.b16 %v421
    %v1250 = vunpack.c.h.b16 %v421
    %v1251 = vunpack.c.l.b16 %v422
    %v1252 = vunpack.c.h.b16 %v422
    %v1253 = vunpack.c.l.b16 %v423
    %v1254 = vunpack.c.h.b16 %v423
    %v1255 = vunpack.c.l.b16 %v424
    %v1256 = vunpack.c.h.b16 %v424
    %v1257 = vunpack.c.l.b16 %v425
    %v1258 = vunpack.c.h.b16 %v425
    %v1259 = vunpack.c.l.b16 %v426
    %v1260 = vunpack.c.h.b16 %v426
    %v1261 = vunpack.c.l.b16 %v427
    %v1262 = vunpack.c.h.b16 %v427
    %v1263 = vunpack.c.l.b16 %v428
    %v1264 = vunpack.c.h.b16 %v428
    %v1265 = vunpack.c.l.b16 %v429
    %v1266 = vunpack.c.h.b16 %v429
    %v1267 = vunpack.c.l.b16 %v430
    %v1268 = vunpack.c.h.b16 %v430
    %v1269 = vunpack.c.l.b16 %v431
    %v1270 = vunpack.c.h.b16 %v431
    %v1271 = vunpack.c.l.b16 %v432
    %v1272 = vunpack.c.h.b16 %v432
    %v1273 = vunpack.c.l.b16 %v433
    %v1274 = vunpack.c.h.b16 %v433
    %v1275 = vunpack.c.l.b16 %v434
    %v1276 = vunpack.c.h.b16 %v434
    %v1277 = vunpack.c.l.b16 %v435
    %v1278 = vunpack.c.h.b16 %v435
    %v1279 = vunpack.c.l.b16 %v436
    %v1280 = vunpack.c.h.b16 %v436
    %v1281 = vunpack.c.l.b16 %v437
    %v1282 = vunpack.c.h.b16 %v437
    %v1283 = vunpack.c.l.b16 %v438
    %v1284 = vunpack.c.h.b16 %v438
    %v1285 = vunpack.c.l.b16 %v439
    %v1286 = vunpack.c.h.b16 %v439
    %v1287 = vunpack.c.l.b16 %v440
    %v1288 = vunpack.c.h.b16 %v440
    %v1289 = vunpack.c.l.b16 %v441
    %v1290 = vunpack.c.h.b16 %v441
    %v1291 = vunpack.c.l.b16 %v442
    %v1292 = vunpack.c.h.b16 %v442
    %v1293 = vunpack.c.l.b16 %v443
    %v1294 = vunpack.c.h.b16 %v443
    %v1295 = vunpack.c.l.b16 %v444
    %v1296 = vunpack.c.h.b16 %v444
    %v1297 = vunpack.c.l.b16 %v445
    %v1298 = vunpack.c.h.b16 %v445
    %v1299 = vunpack.c.l.b16 %v446
    %v1300 = vunpack.c.h.b16 %v446
    %v1301 = vunpack.c.l.b16 %v447
    %v1302 = vunpack.c.h.b16 %v447
    %v1303 = vunpack.c.l.b16 %v448
    %v1304 = vunpack.c.h.b16 %v448
    %v1305 = vunpack.c.l.b16 %v449
    %v1306 = vunpack.c.h.b16 %v449
    %v1307 = vunpack.c.l.b16 %v450
    %v1308 = vunpack.c.h.b16 %v450
    %v1309 = vunpack.c.l.b16 %v451
    %v1310 = vunpack.c.h.b16 %v451
    %v1311 = vunpack.c.l.b16 %v452
    %v1312 = vunpack.c.h.b16 %v452
    %v1313 = vunpack.c.l.b16 %v453
    %v1314 = vunpack.c.h.b16 %v453
    %v1315 = vunpack.c.l.b16 %v454
    %v1316 = vunpack.c.h.b16 %v454
    %v1317 = vunpack.c.l.b16 %v455
    %v1318 = vunpack.c.h.b16 %v455
    %v1319 = vunpack.c.l.b16 %v456
    %v1320 = vunpack.c.h.b16 %v456
    %v1321 = vunpack.c.l.b16 %v457
    %v1322 = vunpack.c.h.b16 %v457
    %v1323 = vunpack.c.l.b16 %v458
    %v1324 = vunpack.c.h.b16 %v458
    %v1325 = vunpack.c.l.b16 %v459
    %v1326 = vunpack.c.h.b16 %v459
    %v1327 = vunpack.c.l.b16 %v460
    %v1328 = vunpack.c.h.b16 %v460
    %v1329 = vunpack.c.l.b16 %v461
    %v1330 = vunpack.c.h.b16 %v461
    %v1331 = vunpack.c.l.b16 %v462
    %v1332 = vunpack.c.h.b16 %v462
    %v1333 = vpack.c.b16 %v759, %v757
    %v1334 = vpack.c.b16 %v760, %v758
    %v1335 = vpack.c.b16 %v763, %v761
    %v1336 = vpack.c.b16 %v764, %v762
    %v1337 = vpack.c.b16 %v767, %v765
    %v1338 = vpack.c.b16 %v768, %v766
    %v1339 = vpack.c.b16 %v771, %v769
    %v1340 = vpack.c.b16 %v772, %v770
    %v1341 = vpack.c.b16 %v775, %v773
    %v1342 = vpack.c.b16 %v776, %v774
    %v1343 = vpack.c.b16 %v779, %v777
    %v1344 = vpack.c.b16 %v780, %v778
    %v1345 = vpack.c.b16 %v783, %v781
    %v1346 = vpack.c.b16 %v784, %v782
    %v1347 = vpack.c.b16 %v787, %v785
    %v1348 = vpack.c.b16 %v788, %v786
    %v1349 = vpack.c.b16 %v791, %v789
    %v1350 = vpack.c.b16 %v792, %v790
    %v1351 = vpack.c.b16 %v795, %v793
    %v1352 = vpack.c.b16 %v796, %v794
    %v1353 = vpack.c.b16 %v799, %v797
    %v1354 = vpack.c.b16 %v800, %v798
    %v1355 = vpack.c.b16 %v803, %v801
    %v1356 = vpack.c.b16 %v804, %v802
    %v1357 = vpack.c.b16 %v807, %v805
    %v1358 = vpack.c.b16 %v808, %v806
    %v1359 = vpack.c.b16 %v811, %v809
    %v1360 = vpack.c.b16 %v812, %v810
    %v1361 = vpack.c.b16 %v815, %v813
    %v1362 = vpack.c.b16 %v816, %v814
    %v1363 = vpack.c.b16 %v819, %v817
    %v1364 = vpack.c.b16 %v820, %v818
    %v1365 = vpack.c.b16 %v823, %v821
    %v1366 = vpack.c.b16 %v824, %v822
    %v1367 = vpack.c.b16 %v827, %v825
    %v1368 = vpack.c.b16 %v828, %v826
    %v1369 = vpack.c.b16 %v831, %v829
    %v1370 = vpack.c.b16 %v832, %v830
    %v1371 = vpack.c.b16 %v835, %v833
    %v1372 = vpack.c.b16 %v836, %v834
    %v1373 = vpack.c.b16 %v839, %v837
    %v1374 = vpack.c.b16 %v840, %v838
    %v1375 = vpack.c.b16 %v843, %v841
    %v1376 = vpack.c.b16 %v844, %v842
    %v1377 = vpack.c.b16 %v847, %v845
    %v1378 = vpack.c.b16 %v848, %v846
    %v1379 = vpack.c.b16 %v851, %v849
    %v1380 = vpack.c.b16 %v852, %v850
    %v1381 = vpack.c.b16 %v855, %v853
    %v1382 = vpack.c.b16 %v856, %v854
    %v1383 = vpack.c.b16 %v859, %v857
    %v1384 = vpack.c.b16 %v860, %v858
    %v1385 = vpack.c.b16 %v863, %v861
    %v1386 = vpack.c.b16 %v864, %v862
    %v1387 = vpack.c.b16 %v867, %v865
    %v1388 = vpack.c.b16 %v868, %v866
    %v1389 = vpack.c.b16 %v871, %v869
    %v1390 = vpack.c.b16 %v872, %v870
    %v1391 = vpack.c.b16 %v875, %v873
    %v1392 = vpack.c.b16 %v876, %v874
    %v1393 = vpack.c.b16 %v879, %v877
    %v1394 = vpack.c.b16 %v880, %v878
    %v1395 = vpack.c.b16 %v883, %v881
    %v1396 = vpack.c.b16 %v884, %v882
    %v1397 = vpack.c.b16 %v887, %v885
    %v1398 = vpack.c.b16 %v888, %v886
    %v1399 = vpack.c.b16 %v891, %v889
    %v1400 = vpack.c.b16 %v892, %v890
    %v1401 = vpack.c.b16 %v895, %v893
    %v1402 = vpack.c.b16 %v896, %v894
    %v1403 = vpack.c.b16 %v899, %v897
    %v1404 = vpack.c.b16 %v900, %v898
    %v1405 = vpack.c.b16 %v903, %v901
    %v1406 = vpack.c.b16 %v904, %v902
    %v1407 = vpack.c.b16 %v907, %v905
    %v1408 = vpack.c.b16 %v908, %v906
    %v1409 = vpack.c.b16 %v911, %v909
    %v1410 = vpack.c.b16 %v912, %v910
    %v1411 = vpack.c.b16 %v915, %v913
    %v1412 = vpack.c.b16 %v916, %v914
    %v1413 = vpack.c.b16 %v919, %v917
    %v1414 = vpack.c.b16 %v920, %v918
    %v1415 = vpack.c.b16 %v923, %v921
    %v1416 = vpack.c.b16 %v924, %v922
    %v1417 = vpack.c.b16 %v927, %v925
    %v1418 = vpack.c.b16 %v928, %v926
    %v1419 = vpack.c.b16 %v931, %v929
    %v1420 = vpack.c.b16 %v932, %v930
    %v1421 = vpack.c.b16 %v935, %v933
    %v1422 = vpack.c.b16 %v936, %v934
    %v1423 = vpack.c.b16 %v939, %v937
    %v1424 = vpack.c.b16 %v940, %v938
    %v1425 = vpack.c.b16 %v943, %v941
    %v1426 = vpack.c.b16 %v944, %v942
    %v1427 = vpack.c.b16 %v947, %v945
    %v1428 = vpack.c.b16 %v948, %v946
    %v1429 = vpack.c.b16 %v951, %v949
    %v1430 = vpack.c.b16 %v952, %v950
    %v1431 = vpack.c.b16 %v955, %v953
    %v1432 = vpack.c.b16 %v956, %v954
    %v1433 = vpack.c.b16 %v959, %v957
    %v1434 = vpack.c.b16 %v960, %v958
    %v1435 = vpack.c.b16 %v963, %v961
    %v1436 = vpack.c.b16 %v964, %v962
    %v1437 = vpack.c.b16 %v967, %v965
    %v1438 = vpack.c.b16 %v968, %v966
    %v1439 = vpack.c.b16 %v971, %v969
    %v1440 = vpack.c.b16 %v972, %v970
    %v1441 = vpack.c.b16 %v975, %v973
    %v1442 = vpack.c.b16 %v976, %v974
    %v1443 = vpack.c.b16 %v979, %v977
    %v1444 = vpack.c.b16 %v980, %v978
    %v1445 = vpack.c.b16 %v983, %v981
    %v1446 = vpack.c.b16 %v984, %v982
    %v1447 = vpack.c.b16 %v987, %v985
    %v1448 = vpack.c.b16 %v988, %v986
    %v1449 = vpack.c.b16 %v991, %v989
    %v1450 = vpack.c.b16 %v992, %v990
    %v1451 = vpack.c.b16 %v995, %v993
    %v1452 = vpack.c.b16 %v996, %v994
    %v1453 = vpack.c.b16 %v999, %v997
    %v1454 = vpack.c.b16 %v1000, %v998
    %v1455 = vpack.c.b16 %v1003, %v1001
    %v1456 = vpack.c.b16 %v1004, %v1002
    %v1457 = vpack.c.b16 %v1007, %v1005
    %v1458 = vpack.c.b16 %v1008, %v1006
    %v1459 = vpack.c.b16 %v1011, %v1009
    %v1460 = vpack.c.b16 %v1012, %v1010
    %v1461 = vpack.c.b16 %v1015, %v1013
    %v1462 = vpack.c.b16 %v1016, %v1014
    %v1463 = vpack.c.b16 %v1019, %v1017
    %v1464 = vpack.c.b16 %v1020, %v1018
    %v1465 = vpack.c.b16 %v1023, %v1021
    %v1466 = vpack.c.b16 %v1024, %v1022
    %v1467 = vpack.c.b16 %v1027, %v1025
    %v1468 = vpack.c.b16 %v1028, %v1026
    %v1469 = vpack.c.b16 %v1031, %v1029
    %v1470 = vpack.c.b16 %v1032, %v1030
    %v1471 = vpack.c.b16 %v1035, %v1033
    %v1472 = vpack.c.b16 %v1036, %v1034
    %v1473 = vpack.c.b16 %v1039, %v1037
    %v1474 = vpack.c.b16 %v1040, %v1038
    %v1475 = vpack.c.b16 %v1043, %v1041
    %v1476 = vpack.c.b16 %v1044, %v1042
    %v1477 = vpack.c.b16 %v1047, %v1045
    %v1478 = vpack.c.b16 %v1048, %v1046
    %v1479 = vpack.c.b16 %v1051, %v1049
    %v1480 = vpack.c.b16 %v1052, %v1050
    %v1481 = vpack.c.b16 %v1055, %v1053
    %v1482 = vpack.c.b16 %v1056, %v1054
    %v1483 = vpack.c.b16 %v1059, %v1057
    %v1484 = vpack.c.b16 %v1060, %v1058
    %v1485 = vpack.c.b16 %v1063, %v1061
    %v1486 = vpack.c.b16 %v1064, %v1062
    %v1487 = vpack.c.b16 %v1067, %v1065
    %v1488 = vpack.c.b16 %v1068, %v1066
    %v1489 = vpack.c.b16 %v1071, %v1069
    %v1490 = vpack.c.b16 %v1072, %v1070
    %v1491 = vpack.c.b16 %v1075, %v1073
    %v1492 = vpack.c.b16 %v1076, %v1074
    %v1493 = vpack.c.b16 %v1079, %v1077
    %v1494 = vpack.c.b16 %v1080, %v1078
    %v1495 = vpack.c.b16 %v1083, %v1081
    %v1496 = vpack.c.b16 %v1084, %v1082
    %v1497 = vpack.c.b16 %v1087, %v1085
    %v1498 = vpack.c.b16 %v1088, %v1086
    %v1499 = vpack.c.b16 %v1091, %v1089
    %v1500 = vpack.c.b16 %v1092, %v1090
    %v1501 = vpack.c.b16 %v1095, %v1093
    %v1502 = vpack.c.b16 %v1096, %v1094
    %v1503 = vpack.c.b16 %v1099, %v1097
    %v1504 = vpack.c.b16 %v1100, %v1098
    %v1505 = vpack.c.b16 %v1103, %v1101
    %v1506 = vpack.c.b16 %v1104, %v1102
    %v1507 = vpack.c.b16 %v1107, %v1105
    %v1508 = vpack.c.b16 %v1108, %v1106
    %v1509 = vpack.c.b16 %v1111, %v1109
    %v1510 = vpack.c.b16 %v1112, %v1110
    %v1511 = vpack.c.b16 %v1115, %v1113
    %v1512 = vpack.c.b16 %v1116, %v1114
    %v1513 = vpack.c.b16 %v1119, %v1117
    %v1514 = vpack.c.b16 %v1120, %v1118
    %v1515 = vpack.c.b16 %v1123, %v1121
    %v1516 = vpack.c.b16 %v1124, %v1122
    %v1517 = vpack.c.b16 %v1127, %v1125
    %v1518 = vpack.c.b16 %v1128, %v1126
    %v1519 = vpack.c.b16 %v1131, %v1129
    %v1520 = vpack.c.b16 %v1132, %v1130
    %v1521 = vpack.c.b16 %v1135, %v1133
    %v1522 = vpack.c.b16 %v1136, %v1134
    %v1523 = vpack.c.b16 %v1139, %v1137
    %v1524 = vpack.c.b16 %v1140, %v1138
    %v1525 = vpack.c.b16 %v1143, %v1141
    %v1526 = vpack.c.b16 %v1144, %v1142
    %v1527 = vpack.c.b16 %v1147, %v1145
    %v1528 = vpack.c.b16 %v1148, %v1146
    %v1529 = vpack.c.b16 %v1151, %v1149
    %v1530 = vpack.c.b16 %v1152, %v1150
    %v1531 = vpack.c.b16 %v1155, %v1153
    %v1532 = vpack.c.b16 %v1156, %v1154
    %v1533 = vpack.c.b16 %v1159, %v1157
    %v1534 = vpack.c.b16 %v1160, %v1158
    %v1535 = vpack.c.b16 %v1163, %v1161
    %v1536 = vpack.c.b16 %v1164, %v1162
    %v1537 = vpack.c.b16 %v1167, %v1165
    %v1538 = vpack.c.b16 %v1168, %v1166
    %v1539 = vpack.c.b16 %v1171, %v1169
    %v1540 = vpack.c.b16 %v1172, %v1170
    %v1541 = vpack.c.b16 %v1175, %v1173
    %v1542 = vpack.c.b16 %v1176, %v1174
    %v1543 = vpack.c.b16 %v1179, %v1177
    %v1544 = vpack.c.b16 %v1180, %v1178
    %v1545 = vpack.c.b16 %v1183, %v1181
    %v1546 = vpack.c.b16 %v1184, %v1182
    %v1547 = vpack.c.b16 %v1187, %v1185
    %v1548 = vpack.c.b16 %v1188, %v1186
    %v1549 = vpack.c.b16 %v1191, %v1189
    %v1550 = vpack.c.b16 %v1192, %v1190
    %v1551 = vpack.c.b16 %v1195, %v1193
    %v1552 = vpack.c.b16 %v1196, %v1194
    %v1553 = vpack.c.b16 %v1199, %v1197
    %v1554 = vpack.c.b16 %v1200, %v1198
    %v1555 = vpack.c.b16 %v1203, %v1201
    %v1556 = vpack.c.b16 %v1204, %v1202
    %v1557 = vpack.c.b16 %v1207, %v1205
    %v1558 = vpack.c.b16 %v1208, %v1206
    %v1559 = vpack.c.b16 %v1211, %v1209
    %v1560 = vpack.c.b16 %v1212, %v1210
    %v1561 = vpack.c.b16 %v1215, %v1213
    %v1562 = vpack.c.b16 %v1216, %v1214
    %v1563 = vpack.c.b16 %v1219, %v1217
    %v1564 = vpack.c.b16 %v1220, %v1218
    %v1565 = vpack.c.b16 %v1223, %v1221
    %v1566 = vpack.c.b16 %v1224, %v1222
    %v1567 = vpack.c.b16 %v1227, %v1225
    %v1568 = vpack.c.b16 %v1228, %v1226
    %v1569 = vpack.c.b16 %v1231, %v1229
    %v1570 = vpack.c.b16 %v1232, %v1230
    %v1571 = vpack.c.b16 %v1235, %v1233
    %v1572 = vpack.c.b16 %v1236, %v1234
    %v1573 = vpack.c.b16 %v1239, %v1237
    %v1574 = vpack.c.b16 %v1240, %v1238
    %v1575 = vpack.c.b16 %v1243, %v1241
    %v1576 = vpack.c.b16 %v1244, %v1242
    %v1577 = vpack.c.b16 %v1247, %v1245
    %v1578 = vpack.c.b16 %v1248, %v1246
    %v1579 = vpack.c.b16 %v1251, %v1249
    %v1580 = vpack.c.b16 %v1252, %v1250
    %v1581 = vpack.c.b16 %v1255, %v1253
    %v1582 = vpack.c.b16 %v1256, %v1254
    %v1583 = vpack.c.b16 %v1259, %v1257
    %v1584 = vpack.c.b16 %v1260, %v1258
    %v1585 = vpack.c.b16 %v1263, %v1261
    %v1586 = vpack.c.b16 %v1264, %v1262
    %v1587 = vpack.c.b16 %v1267, %v1265
    %v1588 = vpack.c.b16 %v1268, %v1266
    %v1589 = vpack.c.b16 %v1271, %v1269
    %v1590 = vpack.c.b16 %v1272, %v1270
    %v1591 = vpack.c.b16 %v1275, %v1273
    %v1592 = vpack.c.b16 %v1276, %v1274
    %v1593 = vpack.c.b16 %v1279, %v1277
    %v1594 = vpack.c.b16 %v1280, %v1278
    %v1595 = vpack.c.b16 %v1283, %v1281
    %v1596 = vpack.c.b16 %v1284, %v1282
    %v1597 = vpack.c.b16 %v1287, %v1285
    %v1598 = vpack.c.b16 %v1288, %v1286
    %v1599 = vpack.c.b16 %v1291, %v1289
    %v1600 = vpack.c.b16 %v1292, %v1290
    %v1601 = vpack.c.b16 %v1295, %v1293
    %v1602 = vpack.c.b16 %v1296, %v1294
    %v1603 = vpack.c.b16 %v1299, %v1297
    %v1604 = vpack.c.b16 %v1300, %v1298
    %v1605 = vpack.c.b16 %v1303, %v1301
    %v1606 = vpack.c.b16 %v1304, %v1302
    %v1607 = vpack.c.b16 %v1307, %v1305
    %v1608 = vpack.c.b16 %v1308, %v1306
    %v1609 = vpack.c.b16 %v1311, %v1309
    %v1610 = vpack.c.b16 %v1312, %v1310
    %v1611 = vpack.c.b16 %v1315, %v1313
    %v1612 = vpack.c.b16 %v1316, %v1314
    %v1613 = vpack.c.b16 %v1319, %v1317
    %v1614 = vpack.c.b16 %v1320, %v1318
    %v1615 = vpack.c.b16 %v1323, %v1321
    %v1616 = vpack.c.b16 %v1324, %v1322
    %v1617 = vpack.c.b16 %v1327, %v1325
    %v1618 = vpack.c.b16 %v1328, %v1326
    %v1619 = vpack.c.b16 %v1331, %v1329
    %v1620 = vpack.c.b16 %v1332, %v1330
    %1909 = vmatpush.bf16.msra.mxu0 %v1347
    %1910 = vmatpush.bf16.msra.mxu0 %v1345
    %1911 = vmatpush.bf16.msra.mxu0 %v1343
    %1912 = vmatpush.bf16.msra.mxu0 %v1341
    %1913 = vmatpush.bf16.msra.mxu0 %v1339
    %1914 = vmatpush.bf16.msra.mxu0 %v1337
    %1915 = vmatpush.bf16.msra.mxu0 %v1335
    %1916 = vmatpush.bf16.msra.mxu0 %v1333
    %1917 = vmatmul.bf16.gmra.mxu0 %v157
    %v1918 = vpop.f32.mrf.mxu0
    %v1919 = vadd.f32 %v465, %v1918
    %v1920 = vpop.f32.mrf.mxu0
    %1921 = vdwg.mxu0
    %1922 = vmatpush.bf16.msra.mxu0 %v1363
    %1923 = vmatpush.bf16.msra.mxu0 %v1361
    %1924 = vmatpush.bf16.msra.mxu0 %v1359
    %1925 = vmatpush.bf16.msra.mxu0 %v1357
    %1926 = vmatpush.bf16.msra.mxu0 %v1355
    %1927 = vmatpush.bf16.msra.mxu0 %v1353
    %1928 = vmatpush.bf16.msra.mxu0 %v1351
    %1929 = vmatpush.bf16.msra.mxu0 %v1349
    %1930 = vmatmul.bf16.gmra.mxu0 %v158
    %v1931 = vpop.f32.mrf.mxu0
    %v1932 = vadd.f32 %v1919, %v1931
    %v1933 = vpop.f32.mrf.mxu0
    %1934 = vdwg.mxu0
    %1935 = vmatpush.bf16.msra.mxu0 %v1379
    %1936 = vmatpush.bf16.msra.mxu0 %v1377
    %1937 = vmatpush.bf16.msra.mxu0 %v1375
    %1938 = vmatpush.bf16.msra.mxu0 %v1373
    %1939 = vmatpush.bf16.msra.mxu0 %v1371
    %1940 = vmatpush.bf16.msra.mxu0 %v1369
    %1941 = vmatpush.bf16.msra.mxu0 %v1367
    %1942 = vmatpush.bf16.msra.mxu0 %v1365
    %1943 = vmatmul.bf16.gmra.mxu0 %v159
    %v1944 = vpop.f32.mrf.mxu0
    %v1945 = vadd.f32 %v1932, %v1944
    %v1946 = vpop.f32.mrf.mxu0
    %1947 = vdwg.mxu0
    %1948 = vmatpush.bf16.msra.mxu0 %v1395
    %1949 = vmatpush.bf16.msra.mxu0 %v1393
    %1950 = vmatpush.bf16.msra.mxu0 %v1391
    %1951 = vmatpush.bf16.msra.mxu0 %v1389
    %1952 = vmatpush.bf16.msra.mxu0 %v1387
    %1953 = vmatpush.bf16.msra.mxu0 %v1385
    %1954 = vmatpush.bf16.msra.mxu0 %v1383
    %1955 = vmatpush.bf16.msra.mxu0 %v1381
    %1956 = vmatmul.bf16.gmra.mxu0 %v160
    %v1957 = vpop.f32.mrf.mxu0
    %v1958 = vadd.f32 %v1945, %v1957
    %v1959 = vpop.f32.mrf.mxu0
    %1960 = vdwg.mxu0
    %1961 = vmatpush.bf16.msra.mxu0 %v1411
    %1962 = vmatpush.bf16.msra.mxu0 %v1409
    %1963 = vmatpush.bf16.msra.mxu0 %v1407
    %1964 = vmatpush.bf16.msra.mxu0 %v1405
    %1965 = vmatpush.bf16.msra.mxu0 %v1403
    %1966 = vmatpush.bf16.msra.mxu0 %v1401
    %1967 = vmatpush.bf16.msra.mxu0 %v1399
    %1968 = vmatpush.bf16.msra.mxu0 %v1397
    %1969 = vmatmul.bf16.gmra.mxu0 %v161
    %v1970 = vpop.f32.mrf.mxu0
    %v1971 = vadd.f32 %v1958, %v1970
    %v1972 = vpop.f32.mrf.mxu0
    %1973 = vdwg.mxu0
    %1974 = vmatpush.bf16.msra.mxu0 %v1427
    %1975 = vmatpush.bf16.msra.mxu0 %v1425
    %1976 = vmatpush.bf16.msra.mxu0 %v1423
    %1977 = vmatpush.bf16.msra.mxu0 %v1421
    %1978 = vmatpush.bf16.msra.mxu0 %v1419
    %1979 = vmatpush.bf16.msra.mxu0 %v1417
    %1980 = vmatpush.bf16.msra.mxu0 %v1415
    %1981 = vmatpush.bf16.msra.mxu0 %v1413
    %1982 = vmatmul.bf16.gmra.mxu0 %v162
    %v1983 = vpop.f32.mrf.mxu0
    %v1984 = vadd.f32 %v1971, %v1983
    %v1985 = vpop.f32.mrf.mxu0
    %1986 = vdwg.mxu0
    %1987 = vmatpush.bf16.msra.mxu0 %v1443
    %1988 = vmatpush.bf16.msra.mxu0 %v1441
    %1989 = vmatpush.bf16.msra.mxu0 %v1439
    %1990 = vmatpush.bf16.msra.mxu0 %v1437
    %1991 = vmatpush.bf16.msra.mxu0 %v1435
    %1992 = vmatpush.bf16.msra.mxu0 %v1433
    %1993 = vmatpush.bf16.msra.mxu0 %v1431
    %1994 = vmatpush.bf16.msra.mxu0 %v1429
    %1995 = vmatmul.bf16.gmra.mxu0 %v163
    %v1996 = vpop.f32.mrf.mxu0
    %v1997 = vadd.f32 %v1984, %v1996
    %v1998 = vpop.f32.mrf.mxu0
    %1999 = vdwg.mxu0
    %2000 = vmatpush.bf16.msra.mxu0 %v1459
    %2001 = vmatpush.bf16.msra.mxu0 %v1457
    %2002 = vmatpush.bf16.msra.mxu0 %v1455
    %2003 = vmatpush.bf16.msra.mxu0 %v1453
    %2004 = vmatpush.bf16.msra.mxu0 %v1451
    %2005 = vmatpush.bf16.msra.mxu0 %v1449
    %2006 = vmatpush.bf16.msra.mxu0 %v1447
    %2007 = vmatpush.bf16.msra.mxu0 %v1445
    %2008 = vmatmul.bf16.gmra.mxu0 %v164
    %v2009 = vpop.f32.mrf.mxu0
    %v2010 = vadd.f32 %v1997, %v2009
    %v2011 = vpop.f32.mrf.mxu0
    %2012 = vdwg.mxu0
    %2013 = vmatpush.bf16.msra.mxu0 %v1475
    %2014 = vmatpush.bf16.msra.mxu0 %v1473
    %2015 = vmatpush.bf16.msra.mxu0 %v1471
    %2016 = vmatpush.bf16.msra.mxu0 %v1469
    %2017 = vmatpush.bf16.msra.mxu0 %v1467
    %2018 = vmatpush.bf16.msra.mxu0 %v1465
    %2019 = vmatpush.bf16.msra.mxu0 %v1463
    %2020 = vmatpush.bf16.msra.mxu0 %v1461
    %2021 = vmatmul.bf16.gmra.mxu0 %v165
    %v2022 = vpop.f32.mrf.mxu0
    %v2023 = vadd.f32 %v2010, %v2022
    %v2024 = vpop.f32.mrf.mxu0
    %2025 = vdwg.mxu0
    %2026 = vmatpush.bf16.msra.mxu0 %v1491
    %2027 = vmatpush.bf16.msra.mxu0 %v1489
    %2028 = vmatpush.bf16.msra.mxu0 %v1487
    %2029 = vmatpush.bf16.msra.mxu0 %v1485
    %2030 = vmatpush.bf16.msra.mxu0 %v1483
    %2031 = vmatpush.bf16.msra.mxu0 %v1481
    %2032 = vmatpush.bf16.msra.mxu0 %v1479
    %2033 = vmatpush.bf16.msra.mxu0 %v1477
    %2034 = vmatmul.bf16.gmra.mxu0 %v166
    %v2035 = vpop.f32.mrf.mxu0
    %v2036 = vadd.f32 %v2023, %v2035
    %v2037 = vpop.f32.mrf.mxu0
    %2038 = vdwg.mxu0
    %2039 = vmatpush.bf16.msra.mxu0 %v1507
    %2040 = vmatpush.bf16.msra.mxu0 %v1505
    %2041 = vmatpush.bf16.msra.mxu0 %v1503
    %2042 = vmatpush.bf16.msra.mxu0 %v1501
    %2043 = vmatpush.bf16.msra.mxu0 %v1499
    %2044 = vmatpush.bf16.msra.mxu0 %v1497
    %2045 = vmatpush.bf16.msra.mxu0 %v1495
    %2046 = vmatpush.bf16.msra.mxu0 %v1493
    %2047 = vmatmul.bf16.gmra.mxu0 %v167
    %v2048 = vpop.f32.mrf.mxu0
    %v2049 = vadd.f32 %v2036, %v2048
    %v2050 = vpop.f32.mrf.mxu0
    %2051 = vdwg.mxu0
    %2052 = vmatpush.bf16.msra.mxu0 %v1523
    %2053 = vmatpush.bf16.msra.mxu0 %v1521
    %2054 = vmatpush.bf16.msra.mxu0 %v1519
    %2055 = vmatpush.bf16.msra.mxu0 %v1517
    %2056 = vmatpush.bf16.msra.mxu0 %v1515
    %2057 = vmatpush.bf16.msra.mxu0 %v1513
    %2058 = vmatpush.bf16.msra.mxu0 %v1511
    %2059 = vmatpush.bf16.msra.mxu0 %v1509
    %2060 = vmatmul.bf16.gmra.mxu0 %v168
    %v2061 = vpop.f32.mrf.mxu0
    %v2062 = vadd.f32 %v2049, %v2061
    %v2063 = vpop.f32.mrf.mxu0
    %2064 = vdwg.mxu0
    %2065 = vmatpush.bf16.msra.mxu0 %v1539
    %2066 = vmatpush.bf16.msra.mxu0 %v1537
    %2067 = vmatpush.bf16.msra.mxu0 %v1535
    %2068 = vmatpush.bf16.msra.mxu0 %v1533
    %2069 = vmatpush.bf16.msra.mxu0 %v1531
    %2070 = vmatpush.bf16.msra.mxu0 %v1529
    %2071 = vmatpush.bf16.msra.mxu0 %v1527
    %2072 = vmatpush.bf16.msra.mxu0 %v1525
    %2073 = vmatmul.bf16.gmra.mxu0 %v169
    %v2074 = vpop.f32.mrf.mxu0
    %v2075 = vadd.f32 %v2062, %v2074
    %v2076 = vpop.f32.mrf.mxu0
    %2077 = vdwg.mxu0
    %2078 = vmatpush.bf16.msra.mxu0 %v1555
    %2079 = vmatpush.bf16.msra.mxu0 %v1553
    %2080 = vmatpush.bf16.msra.mxu0 %v1551
    %2081 = vmatpush.bf16.msra.mxu0 %v1549
    %2082 = vmatpush.bf16.msra.mxu0 %v1547
    %2083 = vmatpush.bf16.msra.mxu0 %v1545
    %2084 = vmatpush.bf16.msra.mxu0 %v1543
    %2085 = vmatpush.bf16.msra.mxu0 %v1541
    %2086 = vmatmul.bf16.gmra.mxu0 %v170
    %v2087 = vpop.f32.mrf.mxu0
    %v2088 = vadd.f32 %v2075, %v2087
    %v2089 = vpop.f32.mrf.mxu0
    %2090 = vdwg.mxu0
    %2091 = vmatpush.bf16.msra.mxu0 %v1571
    %2092 = vmatpush.bf16.msra.mxu0 %v1569
    %2093 = vmatpush.bf16.msra.mxu0 %v1567
    %2094 = vmatpush.bf16.msra.mxu0 %v1565
    %2095 = vmatpush.bf16.msra.mxu0 %v1563
    %2096 = vmatpush.bf16.msra.mxu0 %v1561
    %2097 = vmatpush.bf16.msra.mxu0 %v1559
    %2098 = vmatpush.bf16.msra.mxu0 %v1557
    %2099 = vmatmul.bf16.gmra.mxu0 %v171
    %v2100 = vpop.f32.mrf.mxu0
    %v2101 = vadd.f32 %v2088, %v2100
    %v2102 = vpop.f32.mrf.mxu0
    %2103 = vdwg.mxu0
    %2104 = vmatpush.bf16.msra.mxu0 %v1587
    %2105 = vmatpush.bf16.msra.mxu0 %v1585
    %2106 = vmatpush.bf16.msra.mxu0 %v1583
    %2107 = vmatpush.bf16.msra.mxu0 %v1581
    %2108 = vmatpush.bf16.msra.mxu0 %v1579
    %2109 = vmatpush.bf16.msra.mxu0 %v1577
    %2110 = vmatpush.bf16.msra.mxu0 %v1575
    %2111 = vmatpush.bf16.msra.mxu0 %v1573
    %2112 = vmatmul.bf16.gmra.mxu0 %v172
    %v2113 = vpop.f32.mrf.mxu0
    %v2114 = vadd.f32 %v2101, %v2113
    %v2115 = vpop.f32.mrf.mxu0
    %2116 = vdwg.mxu0
    %2117 = vmatpush.bf16.msra.mxu0 %v1603
    %2118 = vmatpush.bf16.msra.mxu0 %v1601
    %2119 = vmatpush.bf16.msra.mxu0 %v1599
    %2120 = vmatpush.bf16.msra.mxu0 %v1597
    %2121 = vmatpush.bf16.msra.mxu0 %v1595
    %2122 = vmatpush.bf16.msra.mxu0 %v1593
    %2123 = vmatpush.bf16.msra.mxu0 %v1591
    %2124 = vmatpush.bf16.msra.mxu0 %v1589
    %2125 = vmatmul.bf16.gmra.mxu0 %v173
    %v2126 = vpop.f32.mrf.mxu0
    %v2127 = vadd.f32 %v2114, %v2126
    %v2128 = vpop.f32.mrf.mxu0
    %2129 = vdwg.mxu0
    %2130 = vmatpush.bf16.msra.mxu0 %v1619
    %2131 = vmatpush.bf16.msra.mxu0 %v1617
    %2132 = vmatpush.bf16.msra.mxu0 %v1615
    %2133 = vmatpush.bf16.msra.mxu0 %v1613
    %2134 = vmatpush.bf16.msra.mxu0 %v1611
    %2135 = vmatpush.bf16.msra.mxu0 %v1609
    %2136 = vmatpush.bf16.msra.mxu0 %v1607
    %2137 = vmatpush.bf16.msra.mxu0 %v1605
    %2138 = vmatmul.bf16.gmra.mxu0 %v174
    %v2139 = vpop.f32.mrf.mxu0
    %v2140 = vadd.f32 %v2127, %v2139
    %v2141 = vpop.f32.mrf.mxu0
    %2142 = vdwg.mxu0
    %2143 = vmatpush.bf16.msra.mxu0 %v1348
    %2144 = vmatpush.bf16.msra.mxu0 %v1346
    %2145 = vmatpush.bf16.msra.mxu0 %v1344
    %2146 = vmatpush.bf16.msra.mxu0 %v1342
    %2147 = vmatpush.bf16.msra.mxu0 %v1340
    %2148 = vmatpush.bf16.msra.mxu0 %v1338
    %2149 = vmatpush.bf16.msra.mxu0 %v1336
    %2150 = vmatpush.bf16.msra.mxu0 %v1334
    %2151 = vmatmul.bf16.gmra.mxu0 %v157
    %v2152 = vpop.f32.mrf.mxu0
    %v2153 = vadd.f32 %v466, %v2152
    %v2154 = vpop.f32.mrf.mxu0
    %2155 = vdwg.mxu0
    %2156 = vmatpush.bf16.msra.mxu0 %v1364
    %2157 = vmatpush.bf16.msra.mxu0 %v1362
    %2158 = vmatpush.bf16.msra.mxu0 %v1360
    %2159 = vmatpush.bf16.msra.mxu0 %v1358
    %2160 = vmatpush.bf16.msra.mxu0 %v1356
    %2161 = vmatpush.bf16.msra.mxu0 %v1354
    %2162 = vmatpush.bf16.msra.mxu0 %v1352
    %2163 = vmatpush.bf16.msra.mxu0 %v1350
    %2164 = vmatmul.bf16.gmra.mxu0 %v158
    %v2165 = vpop.f32.mrf.mxu0
    %v2166 = vadd.f32 %v2153, %v2165
    %v2167 = vpop.f32.mrf.mxu0
    %2168 = vdwg.mxu0
    %2169 = vmatpush.bf16.msra.mxu0 %v1380
    %2170 = vmatpush.bf16.msra.mxu0 %v1378
    %2171 = vmatpush.bf16.msra.mxu0 %v1376
    %2172 = vmatpush.bf16.msra.mxu0 %v1374
    %2173 = vmatpush.bf16.msra.mxu0 %v1372
    %2174 = vmatpush.bf16.msra.mxu0 %v1370
    %2175 = vmatpush.bf16.msra.mxu0 %v1368
    %2176 = vmatpush.bf16.msra.mxu0 %v1366
    %2177 = vmatmul.bf16.gmra.mxu0 %v159
    %v2178 = vpop.f32.mrf.mxu0
    %v2179 = vadd.f32 %v2166, %v2178
    %v2180 = vpop.f32.mrf.mxu0
    %2181 = vdwg.mxu0
    %2182 = vmatpush.bf16.msra.mxu0 %v1396
    %2183 = vmatpush.bf16.msra.mxu0 %v1394
    %2184 = vmatpush.bf16.msra.mxu0 %v1392
    %2185 = vmatpush.bf16.msra.mxu0 %v1390
    %2186 = vmatpush.bf16.msra.mxu0 %v1388
    %2187 = vmatpush.bf16.msra.mxu0 %v1386
    %2188 = vmatpush.bf16.msra.mxu0 %v1384
    %2189 = vmatpush.bf16.msra.mxu0 %v1382
    %2190 = vmatmul.bf16.gmra.mxu0 %v160
    %v2191 = vpop.f32.mrf.mxu0
    %v2192 = vadd.f32 %v2179, %v2191
    %v2193 = vpop.f32.mrf.mxu0
    %2194 = vdwg.mxu0
    %2195 = vmatpush.bf16.msra.mxu0 %v1412
    %2196 = vmatpush.bf16.msra.mxu0 %v1410
    %2197 = vmatpush.bf16.msra.mxu0 %v1408
    %2198 = vmatpush.bf16.msra.mxu0 %v1406
    %2199 = vmatpush.bf16.msra.mxu0 %v1404
    %2200 = vmatpush.bf16.msra.mxu0 %v1402
    %2201 = vmatpush.bf16.msra.mxu0 %v1400
    %2202 = vmatpush.bf16.msra.mxu0 %v1398
    %2203 = vmatmul.bf16.gmra.mxu0 %v161
    %v2204 = vpop.f32.mrf.mxu0
    %v2205 = vadd.f32 %v2192, %v2204
    %v2206 = vpop.f32.mrf.mxu0
    %2207 = vdwg.mxu0
    %2208 = vmatpush.bf16.msra.mxu0 %v1428
    %2209 = vmatpush.bf16.msra.mxu0 %v1426
    %2210 = vmatpush.bf16.msra.mxu0 %v1424
    %2211 = vmatpush.bf16.msra.mxu0 %v1422
    %2212 = vmatpush.bf16.msra.mxu0 %v1420
    %2213 = vmatpush.bf16.msra.mxu0 %v1418
    %2214 = vmatpush.bf16.msra.mxu0 %v1416
    %2215 = vmatpush.bf16.msra.mxu0 %v1414
    %2216 = vmatmul.bf16.gmra.mxu0 %v162
    %v2217 = vpop.f32.mrf.mxu0
    %v2218 = vadd.f32 %v2205, %v2217
    %v2219 = vpop.f32.mrf.mxu0
    %2220 = vdwg.mxu0
    %2221 = vmatpush.bf16.msra.mxu0 %v1444
    %2222 = vmatpush.bf16.msra.mxu0 %v1442
    %2223 = vmatpush.bf16.msra.mxu0 %v1440
    %2224 = vmatpush.bf16.msra.mxu0 %v1438
    %2225 = vmatpush.bf16.msra.mxu0 %v1436
    %2226 = vmatpush.bf16.msra.mxu0 %v1434
    %2227 = vmatpush.bf16.msra.mxu0 %v1432
    %2228 = vmatpush.bf16.msra.mxu0 %v1430
    %2229 = vmatmul.bf16.gmra.mxu0 %v163
    %v2230 = vpop.f32.mrf.mxu0
    %v2231 = vadd.f32 %v2218, %v2230
    %v2232 = vpop.f32.mrf.mxu0
    %2233 = vdwg.mxu0
    %2234 = vmatpush.bf16.msra.mxu0 %v1460
    %2235 = vmatpush.bf16.msra.mxu0 %v1458
    %2236 = vmatpush.bf16.msra.mxu0 %v1456
    %2237 = vmatpush.bf16.msra.mxu0 %v1454
    %2238 = vmatpush.bf16.msra.mxu0 %v1452
    %2239 = vmatpush.bf16.msra.mxu0 %v1450
    %2240 = vmatpush.bf16.msra.mxu0 %v1448
    %2241 = vmatpush.bf16.msra.mxu0 %v1446
    %2242 = vmatmul.bf16.gmra.mxu0 %v164
    %v2243 = vpop.f32.mrf.mxu0
    %v2244 = vadd.f32 %v2231, %v2243
    %v2245 = vpop.f32.mrf.mxu0
    %2246 = vdwg.mxu0
    %2247 = vmatpush.bf16.msra.mxu0 %v1476
    %2248 = vmatpush.bf16.msra.mxu0 %v1474
    %2249 = vmatpush.bf16.msra.mxu0 %v1472
    %2250 = vmatpush.bf16.msra.mxu0 %v1470
    %2251 = vmatpush.bf16.msra.mxu0 %v1468
    %2252 = vmatpush.bf16.msra.mxu0 %v1466
    %2253 = vmatpush.bf16.msra.mxu0 %v1464
    %2254 = vmatpush.bf16.msra.mxu0 %v1462
    %2255 = vmatmul.bf16.gmra.mxu0 %v165
    %v2256 = vpop.f32.mrf.mxu0
    %v2257 = vadd.f32 %v2244, %v2256
    %v2258 = vpop.f32.mrf.mxu0
    %2259 = vdwg.mxu0
    %2260 = vmatpush.bf16.msra.mxu0 %v1492
    %2261 = vmatpush.bf16.msra.mxu0 %v1490
    %2262 = vmatpush.bf16.msra.mxu0 %v1488
    %2263 = vmatpush.bf16.msra.mxu0 %v1486
    %2264 = vmatpush.bf16.msra.mxu0 %v1484
    %2265 = vmatpush.bf16.msra.mxu0 %v1482
    %2266 = vmatpush.bf16.msra.mxu0 %v1480
    %2267 = vmatpush.bf16.msra.mxu0 %v1478
    %2268 = vmatmul.bf16.gmra.mxu0 %v166
    %v2269 = vpop.f32.mrf.mxu0
    %v2270 = vadd.f32 %v2257, %v2269
    %v2271 = vpop.f32.mrf.mxu0
    %2272 = vdwg.mxu0
    %2273 = vmatpush.bf16.msra.mxu0 %v1508
    %2274 = vmatpush.bf16.msra.mxu0 %v1506
    %2275 = vmatpush.bf16.msra.mxu0 %v1504
    %2276 = vmatpush.bf16.msra.mxu0 %v1502
    %2277 = vmatpush.bf16.msra.mxu0 %v1500
    %2278 = vmatpush.bf16.msra.mxu0 %v1498
    %2279 = vmatpush.bf16.msra.mxu0 %v1496
    %2280 = vmatpush.bf16.msra.mxu0 %v1494
    %2281 = vmatmul.bf16.gmra.mxu0 %v167
    %v2282 = vpop.f32.mrf.mxu0
    %v2283 = vadd.f32 %v2270, %v2282
    %v2284 = vpop.f32.mrf.mxu0
    %2285 = vdwg.mxu0
    %2286 = vmatpush.bf16.msra.mxu0 %v1524
    %2287 = vmatpush.bf16.msra.mxu0 %v1522
    %2288 = vmatpush.bf16.msra.mxu0 %v1520
    %2289 = vmatpush.bf16.msra.mxu0 %v1518
    %2290 = vmatpush.bf16.msra.mxu0 %v1516
    %2291 = vmatpush.bf16.msra.mxu0 %v1514
    %2292 = vmatpush.bf16.msra.mxu0 %v1512
    %2293 = vmatpush.bf16.msra.mxu0 %v1510
    %2294 = vmatmul.bf16.gmra.mxu0 %v168
    %v2295 = vpop.f32.mrf.mxu0
    %v2296 = vadd.f32 %v2283, %v2295
    %v2297 = vpop.f32.mrf.mxu0
    %2298 = vdwg.mxu0
    %2299 = vmatpush.bf16.msra.mxu0 %v1540
    %2300 = vmatpush.bf16.msra.mxu0 %v1538
    %2301 = vmatpush.bf16.msra.mxu0 %v1536
    %2302 = vmatpush.bf16.msra.mxu0 %v1534
    %2303 = vmatpush.bf16.msra.mxu0 %v1532
    %2304 = vmatpush.bf16.msra.mxu0 %v1530
    %2305 = vmatpush.bf16.msra.mxu0 %v1528
    %2306 = vmatpush.bf16.msra.mxu0 %v1526
    %2307 = vmatmul.bf16.gmra.mxu0 %v169
    %v2308 = vpop.f32.mrf.mxu0
    %v2309 = vadd.f32 %v2296, %v2308
    %v2310 = vpop.f32.mrf.mxu0
    %2311 = vdwg.mxu0
    %2312 = vmatpush.bf16.msra.mxu0 %v1556
    %2313 = vmatpush.bf16.msra.mxu0 %v1554
    %2314 = vmatpush.bf16.msra.mxu0 %v1552
    %2315 = vmatpush.bf16.msra.mxu0 %v1550
    %2316 = vmatpush.bf16.msra.mxu0 %v1548
    %2317 = vmatpush.bf16.msra.mxu0 %v1546
    %2318 = vmatpush.bf16.msra.mxu0 %v1544
    %2319 = vmatpush.bf16.msra.mxu0 %v1542
    %2320 = vmatmul.bf16.gmra.mxu0 %v170
    %v2321 = vpop.f32.mrf.mxu0
    %v2322 = vadd.f32 %v2309, %v2321
    %v2323 = vpop.f32.mrf.mxu0
    %2324 = vdwg.mxu0
    %2325 = vmatpush.bf16.msra.mxu0 %v1572
    %2326 = vmatpush.bf16.msra.mxu0 %v1570
    %2327 = vmatpush.bf16.msra.mxu0 %v1568
    %2328 = vmatpush.bf16.msra.mxu0 %v1566
    %2329 = vmatpush.bf16.msra.mxu0 %v1564
    %2330 = vmatpush.bf16.msra.mxu0 %v1562
    %2331 = vmatpush.bf16.msra.mxu0 %v1560
    %2332 = vmatpush.bf16.msra.mxu0 %v1558
    %2333 = vmatmul.bf16.gmra.mxu0 %v171
    %v2334 = vpop.f32.mrf.mxu0
    %v2335 = vadd.f32 %v2322, %v2334
    %v2336 = vpop.f32.mrf.mxu0
    %2337 = vdwg.mxu0
    %2338 = vmatpush.bf16.msra.mxu0 %v1588
    %2339 = vmatpush.bf16.msra.mxu0 %v1586
    %2340 = vmatpush.bf16.msra.mxu0 %v1584
    %2341 = vmatpush.bf16.msra.mxu0 %v1582
    %2342 = vmatpush.bf16.msra.mxu0 %v1580
    %2343 = vmatpush.bf16.msra.mxu0 %v1578
    %2344 = vmatpush.bf16.msra.mxu0 %v1576
    %2345 = vmatpush.bf16.msra.mxu0 %v1574
    %2346 = vmatmul.bf16.gmra.mxu0 %v172
    %v2347 = vpop.f32.mrf.mxu0
    %v2348 = vadd.f32 %v2335, %v2347
    %v2349 = vpop.f32.mrf.mxu0
    %2350 = vdwg.mxu0
    %2351 = vmatpush.bf16.msra.mxu0 %v1604
    %2352 = vmatpush.bf16.msra.mxu0 %v1602
    %2353 = vmatpush.bf16.msra.mxu0 %v1600
    %2354 = vmatpush.bf16.msra.mxu0 %v1598
    %2355 = vmatpush.bf16.msra.mxu0 %v1596
    %2356 = vmatpush.bf16.msra.mxu0 %v1594
    %2357 = vmatpush.bf16.msra.mxu0 %v1592
    %2358 = vmatpush.bf16.msra.mxu0 %v1590
    %2359 = vmatmul.bf16.gmra.mxu0 %v173
    %v2360 = vpop.f32.mrf.mxu0
    %v2361 = vadd.f32 %v2348, %v2360
    %v2362 = vpop.f32.mrf.mxu0
    %2363 = vdwg.mxu0
    %2364 = vmatpush.bf16.msra.mxu0 %v1620
    %2365 = vmatpush.bf16.msra.mxu0 %v1618
    %2366 = vmatpush.bf16.msra.mxu0 %v1616
    %2367 = vmatpush.bf16.msra.mxu0 %v1614
    %2368 = vmatpush.bf16.msra.mxu0 %v1612
    %2369 = vmatpush.bf16.msra.mxu0 %v1610
    %2370 = vmatpush.bf16.msra.mxu0 %v1608
    %2371 = vmatpush.bf16.msra.mxu0 %v1606
    %2372 = vmatmul.bf16.gmra.mxu0 %v174
    %v2373 = vpop.f32.mrf.mxu0
    %v2374 = vadd.f32 %v2361, %v2373
    %v2375 = vpop.f32.mrf.mxu0
    %2376 = vdwg.mxu0
    %v2377 = vmax.f32 %v2140, 0.0
    %v2378 = vmax.f32 %v2374, 0.0
    %v2379 = vpack.c.bf16 %v2377, %v2377
    %v2380 = vpack.c.bf16 %v2378, %v2378
    %v2381 = vld [vmem:[#allocation9] sm:$0xf]
    %v2382 = vld [vmem:[#allocation9 + $0x4] sm:$0xf]
    %v2383 = vld [vmem:[#allocation9 + $0x8] sm:$0xf]
    %v2384 = vld [vmem:[#allocation9 + $0xc] sm:$0xf]
    %v2385 = vld [vmem:[#allocation9 + $0x10] sm:$0xf]
    %v2386 = vld [vmem:[#allocation9 + $0x14] sm:$0xf]
    %v2387 = vld [vmem:[#allocation9 + $0x18] sm:$0xf]
    %v2388 = vld [vmem:[#allocation9 + $0x1c] sm:$0xf]
    %v2389 = vld [vmem:[#allocation9 + $0x20] sm:$0xf]
    %v2390 = vld [vmem:[#allocation9 + $0x24] sm:$0xf]
    %v2391 = vld [vmem:[#allocation9 + $0x28] sm:$0xf]
    %v2392 = vld [vmem:[#allocation9 + $0x2c] sm:$0xf]
    %v2393 = vld [vmem:[#allocation9 + $0x30] sm:$0xf]
    %v2394 = vld [vmem:[#allocation9 + $0x34] sm:$0xf]
    %v2395 = vld [vmem:[#allocation9 + $0x38] sm:$0xf]
    %v2396 = vld [vmem:[#allocation9 + $0x3c] sm:$0xf]
    %v2397 = vld [vmem:[#allocation9 + $0x40] sm:$0xf]
    %v2398 = vld [vmem:[#allocation9 + $0x44] sm:$0xf]
    %v2399 = vld [vmem:[#allocation9 + $0x48] sm:$0xf]
    %v2400 = vld [vmem:[#allocation9 + $0x4c] sm:$0xf]
    %v2401 = vld [vmem:[#allocation9 + $0x50] sm:$0xf]
    %v2402 = vld [vmem:[#allocation9 + $0x54] sm:$0xf]
    %v2403 = vld [vmem:[#allocation9 + $0x58] sm:$0xf]
    %v2404 = vld [vmem:[#allocation9 + $0x5c] sm:$0xf]
    %v2405 = vld [vmem:[#allocation9 + $0x60] sm:$0xf]
    %v2406 = vld [vmem:[#allocation9 + $0x64] sm:$0xf]
    %v2407 = vld [vmem:[#allocation9 + $0x68] sm:$0xf]
    %v2408 = vld [vmem:[#allocation9 + $0x6c] sm:$0xf]
    %v2409 = vld [vmem:[#allocation9 + $0x70] sm:$0xf]
    %v2410 = vld [vmem:[#allocation9 + $0x74] sm:$0xf]
    %v2411 = vld [vmem:[#allocation9 + $0x78] sm:$0xf]
    %v2412 = vld [vmem:[#allocation9 + $0x7c] sm:$0xf]
    %v2413 = vld [vmem:[#allocation11] sm:$0x1]
    %v2415 = vperm.slane %v2413, 0
    %v2449 = vunpack.c.l.b16 %v2381
    %v2450 = vunpack.c.l.b16 %v2382
    %v2451 = vunpack.c.l.b16 %v2383
    %v2452 = vunpack.c.l.b16 %v2384
    %v2453 = vunpack.c.l.b16 %v2385
    %v2454 = vunpack.c.l.b16 %v2386
    %v2455 = vunpack.c.l.b16 %v2387
    %v2456 = vunpack.c.l.b16 %v2388
    %v2457 = vunpack.c.l.b16 %v2389
    %v2458 = vunpack.c.l.b16 %v2390
    %v2459 = vunpack.c.l.b16 %v2391
    %v2460 = vunpack.c.l.b16 %v2392
    %v2461 = vunpack.c.l.b16 %v2393
    %v2462 = vunpack.c.l.b16 %v2394
    %v2463 = vunpack.c.l.b16 %v2395
    %v2464 = vunpack.c.l.b16 %v2396
    %v2465 = vunpack.c.l.b16 %v2397
    %v2466 = vunpack.c.l.b16 %v2398
    %v2467 = vunpack.c.l.b16 %v2399
    %v2468 = vunpack.c.l.b16 %v2400
    %v2469 = vunpack.c.l.b16 %v2401
    %v2470 = vunpack.c.l.b16 %v2402
    %v2471 = vunpack.c.l.b16 %v2403
    %v2472 = vunpack.c.l.b16 %v2404
    %v2473 = vunpack.c.l.b16 %v2405
    %v2474 = vunpack.c.l.b16 %v2406
    %v2475 = vunpack.c.l.b16 %v2407
    %v2476 = vunpack.c.l.b16 %v2408
    %v2477 = vunpack.c.l.b16 %v2409
    %v2478 = vunpack.c.l.b16 %v2410
    %v2479 = vunpack.c.l.b16 %v2411
    %v2480 = vunpack.c.l.b16 %v2412
    %v2481 = vpack.c.b16 %v2450, %v2449
    %v2482 = vpack.c.b16 %v2452, %v2451
    %v2483 = vpack.c.b16 %v2454, %v2453
    %v2484 = vpack.c.b16 %v2456, %v2455
    %v2485 = vpack.c.b16 %v2458, %v2457
    %v2486 = vpack.c.b16 %v2460, %v2459
    %v2487 = vpack.c.b16 %v2462, %v2461
    %v2488 = vpack.c.b16 %v2464, %v2463
    %v2489 = vpack.c.b16 %v2466, %v2465
    %v2490 = vpack.c.b16 %v2468, %v2467
    %v2491 = vpack.c.b16 %v2470, %v2469
    %v2492 = vpack.c.b16 %v2472, %v2471
    %v2493 = vpack.c.b16 %v2474, %v2473
    %v2494 = vpack.c.b16 %v2476, %v2475
    %v2495 = vpack.c.b16 %v2478, %v2477
    %v2496 = vpack.c.b16 %v2480, %v2479
    %2513 = vmatpush.bf16.msra.mxu0 %v2488
    %2514 = vmatpush.bf16.msra.mxu0 %v2487
    %2515 = vmatpush.bf16.msra.mxu0 %v2486
    %2516 = vmatpush.bf16.msra.mxu0 %v2485
    %2517 = vmatpush.bf16.msra.mxu0 %v2484
    %2518 = vmatpush.bf16.msra.mxu0 %v2483
    %2519 = vmatpush.bf16.msra.mxu0 %v2482
    %2520 = vmatpush.bf16.msra.mxu0 %v2481
    %2521 = vmatmul.bf16.gmra.mxu0 %v2379
    %v2522 = vpop.f32.mrf.mxu0
    %v2523 = vadd.f32 %v2415, %v2522
    %v2524 = vpop.f32.mrf.mxu0
    %2525 = vdwg.mxu0
    %2526 = vmatpush.bf16.msra.mxu0 %v2496
    %2527 = vmatpush.bf16.msra.mxu0 %v2495
    %2528 = vmatpush.bf16.msra.mxu0 %v2494
    %2529 = vmatpush.bf16.msra.mxu0 %v2493
    %2530 = vmatpush.bf16.msra.mxu0 %v2492
    %2531 = vmatpush.bf16.msra.mxu0 %v2491
    %2532 = vmatpush.bf16.msra.mxu0 %v2490
    %2533 = vmatpush.bf16.msra.mxu0 %v2489
    %2534 = vmatmul.bf16.gmra.mxu0 %v2380
    %v2535 = vpop.f32.mrf.mxu0
    %v2536 = vadd.f32 %v2523, %v2535
    %v2537 = vpop.f32.mrf.mxu0
    %2538 = vdwg.mxu0
    %v2539 = vmax.f32 %v2536, 0.0
    %v2540 = vpack.c.bf16 %v2539, %v2539
    %v2541 = vld [vmem:[%s6] sm:$0xf]
    %v2542 = vld [vmem:[%s6 + $0x4] sm:$0xf]
    %v2543 = vld [vmem:[%s6 + $0x8] sm:$0xf]
    %v2544 = vld [vmem:[%s6 + $0xc] sm:$0xf]
    %v2545 = vld [vmem:[%s6 + $0x10] sm:$0xf]
    %v2546 = vld [vmem:[%s6 + $0x14] sm:$0xf]
    %v2547 = vld [vmem:[%s6 + $0x18] sm:$0xf]
    %v2548 = vld [vmem:[%s6 + $0x1c] sm:$0xf]
    %v2549 = vld [vmem:[%s6 + $0x20] sm:$0xf]
    %v2550 = vld [vmem:[%s6 + $0x24] sm:$0xf]
    %v2551 = vld [vmem:[%s6 + $0x28] sm:$0xf]
    %v2552 = vld [vmem:[%s6 + $0x2c] sm:$0xf]
    %v2553 = vld [vmem:[%s6 + $0x30] sm:$0xf]
    %v2554 = vld [vmem:[%s6 + $0x34] sm:$0xf]
    %v2555 = vld [vmem:[%s6 + $0x38] sm:$0xf]
    %v2556 = vld [vmem:[%s6 + $0x3c] sm:$0xf]
    %v2557 = vld [vmem:[#allocation12] sm:$0x1]
    %v2559 = vperm.slane %v2557, 0
    %v2577 = vunpack.c.l.b16 %v2541
    %v2578 = vunpack.c.l.b16 %v2542
    %v2579 = vunpack.c.l.b16 %v2543
    %v2580 = vunpack.c.l.b16 %v2544
    %v2581 = vunpack.c.l.b16 %v2545
    %v2582 = vunpack.c.l.b16 %v2546
    %v2583 = vunpack.c.l.b16 %v2547
    %v2584 = vunpack.c.l.b16 %v2548
    %v2585 = vunpack.c.l.b16 %v2549
    %v2586 = vunpack.c.l.b16 %v2550
    %v2587 = vunpack.c.l.b16 %v2551
    %v2588 = vunpack.c.l.b16 %v2552
    %v2589 = vunpack.c.l.b16 %v2553
    %v2590 = vunpack.c.l.b16 %v2554
    %v2591 = vunpack.c.l.b16 %v2555
    %v2592 = vunpack.c.l.b16 %v2556
    %v2593 = vpack.c.b16 %v2578, %v2577
    %v2594 = vpack.c.b16 %v2580, %v2579
    %v2595 = vpack.c.b16 %v2582, %v2581
    %v2596 = vpack.c.b16 %v2584, %v2583
    %v2597 = vpack.c.b16 %v2586, %v2585
    %v2598 = vpack.c.b16 %v2588, %v2587
    %v2599 = vpack.c.b16 %v2590, %v2589
    %v2600 = vpack.c.b16 %v2592, %v2591
    %2609 = vmatpush.bf16.msra.mxu0 %v2600
    %2610 = vmatpush.bf16.msra.mxu0 %v2599
    %2611 = vmatpush.bf16.msra.mxu0 %v2598
    %2612 = vmatpush.bf16.msra.mxu0 %v2597
    %2613 = vmatpush.bf16.msra.mxu0 %v2596
    %2614 = vmatpush.bf16.msra.mxu0 %v2595
    %2615 = vmatpush.bf16.msra.mxu0 %v2594
    %2616 = vmatpush.bf16.msra.mxu0 %v2593
    %2617 = vmatmul.bf16.gmra.mxu0 %v2540
    %v2618 = vpop.f32.mrf.mxu0
    %v2619 = vadd.f32 %v2559, %v2618
    %v2620 = vpop.f32.mrf.mxu0
    %2621 = vdwg.mxu0
    %v2622 = vmax.f32 %v2619, 0.0
    %v2623 = vld [vmem:[#allocation14] sm:$0x1]
    %v2625 = vperm.slane %v2623, 0
    %v2627 = vmul.f32 %v2622, %v2625
    %vm2628 = vcmask 523264
    %v2629 = vsel %vm2628, %v2627, 0.0
    %2630 = vadd.xlane.f32.xlu0 %v2629
    %v2631 = vpop.xlane.xlu0 %2630
    %v2632 = vld [vmem:[#allocation2] sm:$0x1]
    %v2634 = vperm.slane %v2632, 0
    %v2636 = vadd.f32 %v2631, %v2634
    %v2637 = vsub.f32 0.0, %v2636
    %v2638 = vmul.f32 %v2637, 1.442695
    %v2639 = vpow.pop %v2638
    %v2640 = vadd.f32 %v2639, 1.0
    %v2641 = vrcp.pop %v2640
    %v2642 = vmul.f32 %v2640, %v2641
    %v2643 = vsub.f32 1.0, %v2642
    %v2644 = vmul.f32 %v2641, %v2643
    %v2645 = vadd.f32 %v2641, %v2644
    %vm2646 = vweird.f32 %v2640
    %vm2647 = vweird.f32 %v2641
    %vm2648 = vmor %vm2646, %vm2647
    %v2649 = vsel %vm2648, %v2641, %v2645
    %v2650 = vand.u32 2147483647, %v2640
    %vm2651 = vcmp.eq.f32.partialorder %v2650, 8.507059e+37
    %v2652 = vand.u32 %v2640, 2147483648
    %v2653 = vor.u32 1.1754944e-38, %v2652
    %v2654 = vsel %vm2651, %v2653, %v2649
    %v2655 = vmul.f32 1.0, %v2654
    %vm2656 = vcmask 7168
    %2657 = vst.msk [vmem:[%s10] sm:$0xff] %vm2656, %v2655
    %v2658 = vld [vmem:[%s1] sm:$0xff]
    %v2659 = vlog2.pop %v2655
    %v2660 = vmul.f32 %v2659, 0.6931472
    %v2661 = vmax.f32 %v2660, -100.0
    %v2662 = vsub.f32 1.0, %v2655
    %v2663 = vlog2.pop %v2662
    %v2664 = vmul.f32 %v2663, 0.6931472
    %v2665 = vmax.f32 %v2664, -100.0
    %v2666 = vmul.f32 %v2658, %v2661
    %v2667 = vsub.f32 1.0, %v2658
    %v2668 = vmul.f32 %v2667, %v2665
    %v2669 = vadd.f32 %v2666, %v2668
    %v2670 = vsub.f32 0.0, %v2669
    %s2671 = smul.u32 0, 8
    %v2672 = vlaneseq
    %v2673 = vshrl.u32 %v2672, 7
    %v2674 = vstv %s2671
    %v2675 = vadd.s32 %v2674, %v2673
    %vm2676 = vcmp.lt.s32.totalorder %v2675, 8
    %v2677 = vsel %vm2676, %v2670, 0.0
    %v2678 = vsel %vm2656, %v2677, 0.0
    %2679 = vadd.xlane.f32.xlu0 %v2678
    %v2680 = vpop.xlane.xlu0 %2679
    %v2681 = vrot.slane %v2680, 4
    %v2682 = vadd.f32 %v2680, %v2681
    %v2683 = vrot.slane %v2682, 2
    %v2684 = vadd.f32 %v2682, %v2683
    %v2685 = vrot.slane %v2684, 1
    %v2686 = vadd.f32 %v2684, %v2685
    %s2687 = vtos %v2686
    %s2688 = scalar_lea.smem [#allocation15], 0
    %2689 = sst [smem:[%s2688]] %s2687
    // Predicated region
    $region70: #{tpu_custom_call.1} parent=1 // pred_check
      _
    $region71: #{tpu_custom_call.1} parent=1 // pred_check_branch
      %2691 = sbr.rel (0) target = $region73
    $region72: #{tpu_custom_call.1} parent=1 // pred_region
      _
    $region73: #{tpu_custom_call.1} parent=1 // pred_fallthru
      _
    // Predicated region
    $region74: #{tpu_custom_call.1} parent=1 // pred_check
      _
    $region75: #{tpu_custom_call.1} parent=1 // pred_check_branch
      %2693 = sbr.rel (0) target = $region77
    $region76: #{tpu_custom_call.1} parent=1 // pred_region
      %2695 = vsyncadd [#allocation5], 0
      %s2697 = sshll.u32 %s11, 4
      %s2698 = int_to_ptr.hbm [resolvable:$true] %s2697
      %2700 = dma.smem_to_hbm [#allocation15], 16, %s2698, [#allocation5]
    $region77: #{tpu_custom_call.1} parent=1 // pred_fallthru
      _
    // Predicated region
    $region78: #{tpu_custom_call.1} parent=1 // pred_check
      _
    $region79: #{tpu_custom_call.1} parent=1 // pred_check_branch
      %2702 = sbr.rel (0) target = $region81
    $region80: #{tpu_custom_call.1} parent=1 // pred_region
      _
    $region81: #{tpu_custom_call.1} parent=1 // pred_fallthru
      _
    // Predicated region
    $region82: #{tpu_custom_call.1} parent=1 // pred_check
      _
    $region83: #{tpu_custom_call.1} parent=1 // pred_check_branch
      %2704 = sbr.rel (0) target = $region85
    $region84: #{tpu_custom_call.1} parent=1 // pred_region
      %2706 = dma.done [#allocation5], 16
    $region85: #{tpu_custom_call.1} parent=1 // pred_fallthru
      _
    %2707 = sfence
    %2708 = vsyncpa [#allocation4], 1
    %2709 = vsyncpa [#allocation7], 1
    %2710 = vsyncpa [#allocation10], 1
    %2711 = vsyncpa [#allocation13], 1
    %2712 = vsyncpa [#allocation5], 1

</llo_original>
